<compile_context>
chip_gen: v6e
topology: v6e:2x2x1
jax: 0.10.0
libtpu: 0.0.40
codegen_flags: <defaults>
</compile_context>

<pallas_src>
import functools

import jax
import jax.numpy as jnp
import numpy as np
from jax.experimental import pallas as pl
from jax.experimental.pallas import tpu as pltpu

TILE_B = 8      # batch tile (sublane multiple); grid axis -> parallel across TCs on v7x
LANE = 128      # lane width; hidden size padded to a full lane group per gate


def gru_seq_kernel(len_ref, x_ref, wih_ref, whh_ref, bg_ref, bn_ref, out_ref, gx_ref):
    """GRU over one TILE_B-row batch tile, full T sequence, single grid step.

    len_ref : (TILE_B, 1)       int32  sequence lengths (padded rows are 0 -> never selected)
    x_ref   : (T*TILE_B, E)     bf16   embedded inputs, time-major within the tile
    wih_ref : (E, 3*Hp)         bf16   fused input weights, gate order (r, z, n), zero-padded
    whh_ref : (Hp, 3*Hp)        f32    fused recurrent weights, zero-padded
    bg_ref  : (1, 3*Hp)         f32    hoisted bias: (bih_r+bhh_r, bih_z+bhh_z, bih_n)
    bn_ref  : (1, Hp)           f32    bhh_n (must stay inside r*(.) for torch semantics)
    out_ref : (TILE_B, Hp)      f32    hidden state at t = seq_len - 1
    gx_ref  : (T*TILE_B, 3*Hp)  f32    VMEM scratch for the hoisted input projection
    """
    B = len_ref.shape[0]
    T = x_ref.shape[0] // B
    H = out_ref.shape[1]            # padded hidden size (lane-aligned, gates fused as 3*H)

    # --- Phase 1: hoisted input projection, ONE MXU matmul for all T steps.
    # bf16 operands, f32 accumulation; parked in VMEM scratch so it never occupies
    # vregs across the unrolled recurrence.
    gx_ref[...] = (jnp.dot(x_ref[...], wih_ref[...],
                           preferred_element_type=jnp.float32)
                   + bg_ref[...])

    bn = bn_ref[...]                                            # (1, H): one vreg
    # Hoist the (B, H) broadcast of seq_len-1 once (JAX doesn't CSE broadcast_in_dim,
    # so doing it inside the unrolled loop would re-emit it T times).
    seq_last = jnp.broadcast_to(len_ref[...] - 1, (B, H))       # (B, H) int32

    h = jnp.zeros((B, H), jnp.float32)
    out = jnp.zeros((B, H), jnp.float32)

    # --- Phase 2: serial recurrence, fully unrolled (T static & small). gx and whh
    # are re-read from VMEM each step (vld slots are plentiful) instead of being held
    # live across the loop, keeping vreg pressure at ~4 loop-carried vregs.
    # TODO(synk): holding whh in MXU staging via pltpu.matmul_push_rhs/acc_lhs/pop
    # would avoid re-streaming the RHS every step; kept on jnp.dot for robustness.
    for t in range(T):
        gx = gx_ref[t * B:(t + 1) * B, :]                       # (B, 3H) static slice
        gh = jnp.dot(h, whh_ref[...], preferred_element_type=jnp.float32)
        # PyTorch nn.GRU gate order: reset, update, new.
        r = jax.nn.sigmoid(gx[:, 0:H] + gh[:, 0:H])
        z = jax.nn.sigmoid(gx[:, H:2 * H] + gh[:, H:2 * H])
        n = jnp.tanh(gx[:, 2 * H:3 * H] + r * (gh[:, 2 * H:3 * H] + bn))
        h = n + z * (h - n)                                     # == (1 - z) * n + z * h
        # seq_out.gather(1, seq_len-1): keep h at the row's last valid step.
        out = jnp.where(seq_last == t, h, out)

    out_ref[...] = out


def prepare_params(params):
    """One-time parameter prep (hoisted out of the per-call forward).

    Fuses the 3 gates along the lane axis, zero-pads H -> Hp (full lane group per
    gate), folds the r/z hidden biases into the hoisted input bias, and pre-casts
    the MXU-heavy operands (embedding table, input weights) to bf16. Zero padding
    keeps padded hidden lanes at exactly 0 through the recurrence.
    """
    E = params["wih"].shape[1]
    H = params["whh"].shape[-1]
    Hp = ((H + LANE - 1) // LANE) * LANE

    wih_f = jnp.zeros((E, 3 * Hp), jnp.float32)
    whh_f = jnp.zeros((Hp, 3 * Hp), jnp.float32)
    bg_f = jnp.zeros((1, 3 * Hp), jnp.float32)
    bn_f = jnp.zeros((1, Hp), jnp.float32)
    for g in range(3):
        wih_f = wih_f.at[:, g * Hp:g * Hp + H].set(params["wih"][g])
        whh_f = whh_f.at[:H, g * Hp:g * Hp + H].set(params["whh"][g])
    # Hoisted bias: r and z gates get bih+bhh folded in; the n gate keeps only bih
    # (bhh_n must remain inside r*(.) per PyTorch GRU semantics).
    bg_f = bg_f.at[:, 0:H].set(params["bih"][0] + params["bhh"][0])
    bg_f = bg_f.at[:, Hp:Hp + H].set(params["bih"][1] + params["bhh"][1])
    bg_f = bg_f.at[:, 2 * Hp:2 * Hp + H].set(params["bih"][2])
    bn_f = bn_f.at[:, 0:H].set(params["bhh"][2])

    return {
        "emb": params["embedding"].astype(jnp.bfloat16),  # gather output lands in bf16
        "wih_f": wih_f.astype(jnp.bfloat16),              # zero padding exact in bf16
        "whh_f": whh_f,                                   # recurrent matmul kept in f32
        "bg_f": bg_f,
        "bn_f": bn_f,
    }


@functools.partial(jax.jit, static_argnames=("out_dim",))
def seq_encoder_forward(seq, seq_len, prep, out_dim):
    B, T = seq.shape
    E = prep["wih_f"].shape[0]
    Hp = prep["whh_f"].shape[0]

    Bp = ((B + TILE_B - 1) // TILE_B) * TILE_B
    nB = Bp // TILE_B

    # Reorder the *ids* (tiny int32 tensor) to batch-tile-major / time-major order and
    # gather the bf16 embedding table directly into the kernel layout: a single HBM
    # pass over the activation, no transpose/pad round-trips on the (T,B,E) array.
    seq_p = jnp.pad(seq.astype(jnp.int32), ((0, Bp - B), (0, 0)))     # (Bp, T)
    seq_tm = seq_p.reshape(nB, TILE_B, T).transpose(0, 2, 1)          # (nB, T, TILE_B)
    x2d = prep["emb"][seq_tm].reshape(nB * T * TILE_B, E)             # bf16

    # Padded rows get seq_len = 0 -> (len-1) never matches any t -> stay zero.
    len2d = jnp.pad(seq_len.astype(jnp.int32), (0, Bp - B)).reshape(Bp, 1)

    out = pl.pallas_call(
        gru_seq_kernel,
        out_shape=jax.ShapeDtypeStruct((Bp, Hp), jnp.float32),
        grid_spec=pltpu.PrefetchScalarGridSpec(
            num_scalar_prefetch=0,
            grid=(nB,),
            in_specs=[
                pl.BlockSpec((TILE_B, 1), lambda b: (b, 0)),          # lengths
                pl.BlockSpec((T * TILE_B, E), lambda b: (b, 0)),      # x (batch-tile major)
                pl.BlockSpec((E, 3 * Hp), lambda b: (0, 0)),          # wih (resident)
                pl.BlockSpec((Hp, 3 * Hp), lambda b: (0, 0)),         # whh (resident)
                pl.BlockSpec((1, 3 * Hp), lambda b: (0, 0)),          # hoisted bias
                pl.BlockSpec((1, Hp), lambda b: (0, 0)),              # bhh_n
            ],
            out_specs=pl.BlockSpec((TILE_B, Hp), lambda b: (b, 0)),   # lane-dense (8,128)
            scratch_shapes=[pltpu.VMEM((T * TILE_B, 3 * Hp), jnp.float32)],
        ),
        compiler_params=pltpu.CompilerParams(
            dimension_semantics=("parallel",),   # batch tiles shard across TCs (v7x)
            vmem_limit_bytes=32 * 1024 * 1024,
        ),
    )(len2d, x2d, prep["wih_f"], prep["whh_f"], prep["bg_f"], prep["bn_f"])

    return out[:B, :out_dim]


def seq_encoder_reference(seq, seq_len, params):
    """Pure-JAX f32 reference matching torch semantics (scan GRU, then gather)."""
    emb = params["embedding"][seq].astype(jnp.float32)     # (B, T, E)
    B, T, E = emb.shape
    H = params["whh"].shape[-1]
    wih, whh, bih, bhh = params["wih"], params["whh"], params["bih"], params["bhh"]

    def step(h, x_t):
        r = jax.nn.sigmoid(x_t @ wih[0] + bih[0] + h @ whh[0] + bhh[0])
        z = jax.nn.sigmoid(x_t @ wih[1] + bih[1] + h @ whh[1] + bhh[1])
        n = jnp.tanh(x_t @ wih[2] + bih[2] + r * (h @ whh[2] + bhh[2]))
        h_new = (1.0 - z) * n + z * h
        return h_new, h_new

    h0 = jnp.zeros((B, H), jnp.float32)
    _, outs = jax.lax.scan(step, h0, jnp.transpose(emb, (1, 0, 2)))
    outs = jnp.transpose(outs, (1, 0, 2))                  # (B, T, H)
    idx = jnp.broadcast_to((seq_len - 1)[:, None, None], (B, 1, H))
    return jnp.take_along_axis(outs, idx, axis=1).squeeze(1)


def init_params(key, embed_num, embed_dim, out_dim):
    """Deterministic init mirroring PyTorch defaults (Embedding ~ N(0,1);
    GRU params ~ U(-1/sqrt(H), 1/sqrt(H)); reset_parameters only touches
    Conv2d/Linear so the GRU keeps its default init)."""
    k_emb, k_wih, k_whh, k_bih, k_bhh = jax.random.split(key, 5)
    bound = 1.0 / np.sqrt(out_dim)
    return {
        "embedding": jax.random.normal(k_emb, (embed_num, embed_dim), jnp.float32),
        # stacked per gate (r, z, n); stored transposed (in_dim, out_dim) for x @ W
        "wih": jax.random.uniform(k_wih, (3, embed_dim, out_dim), jnp.float32,
                                  -bound, bound),
        "whh": jax.random.uniform(k_whh, (3, out_dim, out_dim), jnp.float32,
                                  -bound, bound),
        "bih": jax.random.uniform(k_bih, (3, 1, out_dim), jnp.float32, -bound, bound),
        "bhh": jax.random.uniform(k_bhh, (3, 1, out_dim), jnp.float32, -bound, bound),
    }


if __name__ == "__main__":
    # Small shapes consistent with the module: batch=4, seq=8, embed_dim=16, out_dim=32.
    embed_num, embed_dim, out_dim = 50, 16, 32
    B, T = 4, 8

    key = jax.random.PRNGKey(0)
    k_params, k_seq, k_len = jax.random.split(key, 3)
    params = init_params(k_params, embed_num, embed_dim, out_dim)
    prep = prepare_params(params)          # one-time weight fusion / padding / bf16 cast

    seq = jax.random.randint(k_seq, (B, T), 0, embed_num, dtype=jnp.int32)
    # NOTE: seq_len must be in [1, T]; seq_len=0 would silently yield a zero row
    # (torch.gather with index -1 would error instead).
    seq_len = jax.random.randint(k_len, (B,), 1, T + 1, dtype=jnp.int32)

    out = seq_encoder_forward(seq, seq_len, prep, out_dim)
    out = jax.block_until_ready(out)

    ref = jax.block_until_ready(seq_encoder_reference(seq, seq_len, params))
    # Tolerance accounts for bf16 embedding / input-projection operands
    # (f32 accumulation); the f32 reference differs by O(1e-3) absolute.
    np.testing.assert_allclose(np.asarray(out), np.asarray(ref), rtol=2e-2, atol=5e-3)

    # TODO(synk): encode_type='seq_attn' (SeqAttenEncoder) is not defined in the
    # reference source; only the 'gru' path is implemented.
    print("KERNEL_OK")
</pallas_src>

<mosaic_0001>
module attributes {stable_mosaic.version = 11 : i64} {
  func.func @gru_seq_kernel(%arg0: i32, %arg1: memref<8x1xi32, #tpu.memory_space<vmem>>, %arg2: memref<64x16xbf16, #tpu.memory_space<vmem>>, %arg3: memref<16x384xbf16, #tpu.memory_space<vmem>>, %arg4: memref<128x384xf32, #tpu.memory_space<vmem>>, %arg5: memref<1x384xf32, #tpu.memory_space<vmem>>, %arg6: memref<1x128xf32, #tpu.memory_space<vmem>>, %arg7: memref<8x128xf32, #tpu.memory_space<vmem>>, %arg8: memref<64x384xf32, #tpu.memory_space<vmem>>) attributes {dimension_semantics = [#tpu.dimension_semantics<parallel>], iteration_bounds = array<i64: 1>, scalar_prefetch = 0 : i64, scratch_operands = 1 : i64, tpu.core_type = #tpu.core_type<tc>, window_params = [{transform_indices = @transform_0, window_bounds = array<i64: 8, 1>}, {transform_indices = @transform_1, window_bounds = array<i64: 64, 16>}, {pipeline_mode = #tpu.pipeline_mode<synchronous>, transform_indices = @transform_2, window_bounds = array<i64: 16, 384>}, {pipeline_mode = #tpu.pipeline_mode<synchronous>, transform_indices = @transform_3, window_bounds = array<i64: 128, 384>}, {pipeline_mode = #tpu.pipeline_mode<synchronous>, transform_indices = @transform_4, window_bounds = array<i64: 1, 384>}, {pipeline_mode = #tpu.pipeline_mode<synchronous>, transform_indices = @transform_5, window_bounds = array<i64: 1, 128>}, {transform_indices = @transform_6, window_bounds = array<i64: 8, 128>}]} {
    %c0 = arith.constant 0 : index
    %c0_0 = arith.constant 0 : index
    %0 = vector.load %arg2[%c0, %c0_0] : memref<64x16xbf16, #tpu.memory_space<vmem>>, vector<64x16xbf16>
    %c0_1 = arith.constant 0 : index
    %c0_2 = arith.constant 0 : index
    %1 = vector.load %arg3[%c0_1, %c0_2] : memref<16x384xbf16, #tpu.memory_space<vmem>>, vector<16x384xbf16>
    %cst = arith.constant dense<0.000000e+00> : vector<64x384xf32>
    %2 = tpu.matmul %0, %1, %cst {dimension_numbers = #tpu.dot_dimension_numbers<[1], [0], [0], [1], [0, 0, 1, 1], [], []>} : vector<64x16xbf16>, vector<16x384xbf16>, vector<64x384xf32> -> vector<64x384xf32>
    %c0_3 = arith.constant 0 : index
    %c0_4 = arith.constant 0 : index
    %3 = vector.load %arg5[%c0_3, %c0_4] : memref<1x384xf32, #tpu.memory_space<vmem>>, vector<1x384xf32>
    %4 = vector.broadcast %3 : vector<1x384xf32> to vector<64x384xf32>
    %5 = arith.addf %2, %4 : vector<64x384xf32>
    %c0_5 = arith.constant 0 : index
    %c0_6 = arith.constant 0 : index
    %6 = vector.load %arg8[%c0_5, %c0_6] : memref<64x384xf32, #tpu.memory_space<vmem>>, vector<64x384xf32>
    tpu.vector_store %arg8[%c0_5, %c0_6], %5 {strides = array<i32>} : memref<64x384xf32, #tpu.memory_space<vmem>>, vector<64x384xf32>,
    %c0_7 = arith.constant 0 : index
    %c0_8 = arith.constant 0 : index
    %7 = vector.load %arg6[%c0_7, %c0_8] : memref<1x128xf32, #tpu.memory_space<vmem>>, vector<1x128xf32>
    %c0_9 = arith.constant 0 : index
    %c0_10 = arith.constant 0 : index
    %8 = vector.load %arg1[%c0_9, %c0_10] : memref<8x1xi32, #tpu.memory_space<vmem>>, vector<8x1xi32>
    %c1_i32 = arith.constant 1 : i32
    %9 = vector.broadcast %c1_i32 : i32 to vector<8x1xi32>
    %10 = arith.subi %8, %9 : vector<8x1xi32>
    %11 = vector.shape_cast %10 : vector<8x1xi32> to vector<8x1xi32>
    %12 = vector.broadcast %11 : vector<8x1xi32> to vector<8x128xi32>
    %cst_11 = arith.constant 0.000000e+00 : f32
    %13 = vector.broadcast %cst_11 : f32 to vector<8x128xf32>
    %cst_12 = arith.constant 0.000000e+00 : f32
    %14 = vector.broadcast %cst_12 : f32 to vector<8x128xf32>
    %c0_13 = arith.constant 0 : index
    %c0_14 = arith.constant 0 : index
    %15 = vector.load %arg8[%c0_13, %c0_14] : memref<64x384xf32, #tpu.memory_space<vmem>>, vector<8x384xf32>
    %c0_15 = arith.constant 0 : index
    %c0_16 = arith.constant 0 : index
    %16 = vector.load %arg4[%c0_15, %c0_16] : memref<128x384xf32, #tpu.memory_space<vmem>>, vector<128x384xf32>
    %cst_17 = arith.constant dense<0.000000e+00> : vector<8x384xf32>
    %17 = tpu.matmul %13, %16, %cst_17 {dimension_numbers = #tpu.dot_dimension_numbers<[1], [0], [0], [1], [0, 0, 1, 1], [], []>} : vector<8x128xf32>, vector<128x384xf32>, vector<8x384xf32> -> vector<8x384xf32>
    %18 = vector.extract_strided_slice %15 {offsets = [0, 0], sizes = [8, 128], strides = [1, 1]} : vector<8x384xf32> to vector<8x128xf32>
    %19 = vector.extract_strided_slice %17 {offsets = [0, 0], sizes = [8, 128], strides = [1, 1]} : vector<8x384xf32> to vector<8x128xf32>
    %20 = arith.addf %18, %19 : vector<8x128xf32>
    %21 = arith.negf %20 : vector<8x128xf32>
    %22 = math.exp %21 : vector<8x128xf32>
    %cst_18 = arith.constant 1.000000e+00 : f32
    %23 = vector.broadcast %cst_18 : f32 to vector<8x128xf32>
    %24 = arith.addf %23, %22 : vector<8x128xf32>
    %25 = arith.divf %23, %24 : vector<8x128xf32>
    %26 = vector.extract_strided_slice %15 {offsets = [0, 128], sizes = [8, 128], strides = [1, 1]} : vector<8x384xf32> to vector<8x128xf32>
    %27 = vector.extract_strided_slice %17 {offsets = [0, 128], sizes = [8, 128], strides = [1, 1]} : vector<8x384xf32> to vector<8x128xf32>
    %28 = arith.addf %26, %27 : vector<8x128xf32>
    %29 = arith.negf %28 : vector<8x128xf32>
    %30 = math.exp %29 : vector<8x128xf32>
    %cst_19 = arith.constant 1.000000e+00 : f32
    %31 = vector.broadcast %cst_19 : f32 to vector<8x128xf32>
    %32 = arith.addf %31, %30 : vector<8x128xf32>
    %33 = arith.divf %31, %32 : vector<8x128xf32>
    %34 = vector.extract_strided_slice %15 {offsets = [0, 256], sizes = [8, 128], strides = [1, 1]} : vector<8x384xf32> to vector<8x128xf32>
    %35 = vector.extract_strided_slice %17 {offsets = [0, 256], sizes = [8, 128], strides = [1, 1]} : vector<8x384xf32> to vector<8x128xf32>
    %36 = vector.broadcast %7 : vector<1x128xf32> to vector<8x128xf32>
    %37 = arith.addf %35, %36 : vector<8x128xf32>
    %38 = arith.mulf %25, %37 : vector<8x128xf32>
    %39 = arith.addf %34, %38 : vector<8x128xf32>
    %40 = math.tanh %39 : vector<8x128xf32>
    %41 = arith.subf %13, %40 : vector<8x128xf32>
    %42 = arith.mulf %33, %41 : vector<8x128xf32>
    %43 = arith.addf %40, %42 : vector<8x128xf32>
    %c0_i32 = arith.constant 0 : i32
    %44 = vector.broadcast %c0_i32 : i32 to vector<8x128xi32>
    %45 = arith.cmpi eq, %12, %44 : vector<8x128xi32>
    %46 = arith.select %45, %43, %14 : vector<8x128xi1>, vector<8x128xf32>
    %c8 = arith.constant 8 : index
    %c0_20 = arith.constant 0 : index
    %47 = vector.load %arg8[%c8, %c0_20] : memref<64x384xf32, #tpu.memory_space<vmem>>, vector<8x384xf32>
    %c0_21 = arith.constant 0 : index
    %c0_22 = arith.constant 0 : index
    %48 = vector.load %arg4[%c0_21, %c0_22] : memref<128x384xf32, #tpu.memory_space<vmem>>, vector<128x384xf32>
    %cst_23 = arith.constant dense<0.000000e+00> : vector<8x384xf32>
    %49 = tpu.matmul %43, %48, %cst_23 {dimension_numbers = #tpu.dot_dimension_numbers<[1], [0], [0], [1], [0, 0, 1, 1], [], []>} : vector<8x128xf32>, vector<128x384xf32>, vector<8x384xf32> -> vector<8x384xf32>
    %50 = vector.extract_strided_slice %47 {offsets = [0, 0], sizes = [8, 128], strides = [1, 1]} : vector<8x384xf32> to vector<8x128xf32>
    %51 = vector.extract_strided_slice %49 {offsets = [0, 0], sizes = [8, 128], strides = [1, 1]} : vector<8x384xf32> to vector<8x128xf32>
    %52 = arith.addf %50, %51 : vector<8x128xf32>
    %53 = arith.negf %52 : vector<8x128xf32>
    %54 = math.exp %53 : vector<8x128xf32>
    %cst_24 = arith.constant 1.000000e+00 : f32
    %55 = vector.broadcast %cst_24 : f32 to vector<8x128xf32>
    %56 = arith.addf %55, %54 : vector<8x128xf32>
    %57 = arith.divf %55, %56 : vector<8x128xf32>
    %58 = vector.extract_strided_slice %47 {offsets = [0, 128], sizes = [8, 128], strides = [1, 1]} : vector<8x384xf32> to vector<8x128xf32>
    %59 = vector.extract_strided_slice %49 {offsets = [0, 128], sizes = [8, 128], strides = [1, 1]} : vector<8x384xf32> to vector<8x128xf32>
    %60 = arith.addf %58, %59 : vector<8x128xf32>
    %61 = arith.negf %60 : vector<8x128xf32>
    %62 = math.exp %61 : vector<8x128xf32>
    %cst_25 = arith.constant 1.000000e+00 : f32
    %63 = vector.broadcast %cst_25 : f32 to vector<8x128xf32>
    %64 = arith.addf %63, %62 : vector<8x128xf32>
    %65 = arith.divf %63, %64 : vector<8x128xf32>
    %66 = vector.extract_strided_slice %47 {offsets = [0, 256], sizes = [8, 128], strides = [1, 1]} : vector<8x384xf32> to vector<8x128xf32>
    %67 = vector.extract_strided_slice %49 {offsets = [0, 256], sizes = [8, 128], strides = [1, 1]} : vector<8x384xf32> to vector<8x128xf32>
    %68 = vector.broadcast %7 : vector<1x128xf32> to vector<8x128xf32>
    %69 = arith.addf %67, %68 : vector<8x128xf32>
    %70 = arith.mulf %57, %69 : vector<8x128xf32>
    %71 = arith.addf %66, %70 : vector<8x128xf32>
    %72 = math.tanh %71 : vector<8x128xf32>
    %73 = arith.subf %43, %72 : vector<8x128xf32>
    %74 = arith.mulf %65, %73 : vector<8x128xf32>
    %75 = arith.addf %72, %74 : vector<8x128xf32>
    %c1_i32_26 = arith.constant 1 : i32
    %76 = vector.broadcast %c1_i32_26 : i32 to vector<8x128xi32>
    %77 = arith.cmpi eq, %12, %76 : vector<8x128xi32>
    %78 = arith.select %77, %75, %46 : vector<8x128xi1>, vector<8x128xf32>
    %c16 = arith.constant 16 : index
    %c0_27 = arith.constant 0 : index
    %79 = vector.load %arg8[%c16, %c0_27] : memref<64x384xf32, #tpu.memory_space<vmem>>, vector<8x384xf32>
    %c0_28 = arith.constant 0 : index
    %c0_29 = arith.constant 0 : index
    %80 = vector.load %arg4[%c0_28, %c0_29] : memref<128x384xf32, #tpu.memory_space<vmem>>, vector<128x384xf32>
    %cst_30 = arith.constant dense<0.000000e+00> : vector<8x384xf32>
    %81 = tpu.matmul %75, %80, %cst_30 {dimension_numbers = #tpu.dot_dimension_numbers<[1], [0], [0], [1], [0, 0, 1, 1], [], []>} : vector<8x128xf32>, vector<128x384xf32>, vector<8x384xf32> -> vector<8x384xf32>
    %82 = vector.extract_strided_slice %79 {offsets = [0, 0], sizes = [8, 128], strides = [1, 1]} : vector<8x384xf32> to vector<8x128xf32>
    %83 = vector.extract_strided_slice %81 {offsets = [0, 0], sizes = [8, 128], strides = [1, 1]} : vector<8x384xf32> to vector<8x128xf32>
    %84 = arith.addf %82, %83 : vector<8x128xf32>
    %85 = arith.negf %84 : vector<8x128xf32>
    %86 = math.exp %85 : vector<8x128xf32>
    %cst_31 = arith.constant 1.000000e+00 : f32
    %87 = vector.broadcast %cst_31 : f32 to vector<8x128xf32>
    %88 = arith.addf %87, %86 : vector<8x128xf32>
    %89 = arith.divf %87, %88 : vector<8x128xf32>
    %90 = vector.extract_strided_slice %79 {offsets = [0, 128], sizes = [8, 128], strides = [1, 1]} : vector<8x384xf32> to vector<8x128xf32>
    %91 = vector.extract_strided_slice %81 {offsets = [0, 128], sizes = [8, 128], strides = [1, 1]} : vector<8x384xf32> to vector<8x128xf32>
    %92 = arith.addf %90, %91 : vector<8x128xf32>
    %93 = arith.negf %92 : vector<8x128xf32>
    %94 = math.exp %93 : vector<8x128xf32>
    %cst_32 = arith.constant 1.000000e+00 : f32
    %95 = vector.broadcast %cst_32 : f32 to vector<8x128xf32>
    %96 = arith.addf %95, %94 : vector<8x128xf32>
    %97 = arith.divf %95, %96 : vector<8x128xf32>
    %98 = vector.extract_strided_slice %79 {offsets = [0, 256], sizes = [8, 128], strides = [1, 1]} : vector<8x384xf32> to vector<8x128xf32>
    %99 = vector.extract_strided_slice %81 {offsets = [0, 256], sizes = [8, 128], strides = [1, 1]} : vector<8x384xf32> to vector<8x128xf32>
    %100 = vector.broadcast %7 : vector<1x128xf32> to vector<8x128xf32>
    %101 = arith.addf %99, %100 : vector<8x128xf32>
    %102 = arith.mulf %89, %101 : vector<8x128xf32>
    %103 = arith.addf %98, %102 : vector<8x128xf32>
    %104 = math.tanh %103 : vector<8x128xf32>
    %105 = arith.subf %75, %104 : vector<8x128xf32>
    %106 = arith.mulf %97, %105 : vector<8x128xf32>
    %107 = arith.addf %104, %106 : vector<8x128xf32>
    %c2_i32 = arith.constant 2 : i32
    %108 = vector.broadcast %c2_i32 : i32 to vector<8x128xi32>
    %109 = arith.cmpi eq, %12, %108 : vector<8x128xi32>
    %110 = arith.select %109, %107, %78 : vector<8x128xi1>, vector<8x128xf32>
    %c24 = arith.constant 24 : index
    %c0_33 = arith.constant 0 : index
    %111 = vector.load %arg8[%c24, %c0_33] : memref<64x384xf32, #tpu.memory_space<vmem>>, vector<8x384xf32>
    %c0_34 = arith.constant 0 : index
    %c0_35 = arith.constant 0 : index
    %112 = vector.load %arg4[%c0_34, %c0_35] : memref<128x384xf32, #tpu.memory_space<vmem>>, vector<128x384xf32>
    %cst_36 = arith.constant dense<0.000000e+00> : vector<8x384xf32>
    %113 = tpu.matmul %107, %112, %cst_36 {dimension_numbers = #tpu.dot_dimension_numbers<[1], [0], [0], [1], [0, 0, 1, 1], [], []>} : vector<8x128xf32>, vector<128x384xf32>, vector<8x384xf32> -> vector<8x384xf32>
    %114 = vector.extract_strided_slice %111 {offsets = [0, 0], sizes = [8, 128], strides = [1, 1]} : vector<8x384xf32> to vector<8x128xf32>
    %115 = vector.extract_strided_slice %113 {offsets = [0, 0], sizes = [8, 128], strides = [1, 1]} : vector<8x384xf32> to vector<8x128xf32>
    %116 = arith.addf %114, %115 : vector<8x128xf32>
    %117 = arith.negf %116 : vector<8x128xf32>
    %118 = math.exp %117 : vector<8x128xf32>
    %cst_37 = arith.constant 1.000000e+00 : f32
    %119 = vector.broadcast %cst_37 : f32 to vector<8x128xf32>
    %120 = arith.addf %119, %118 : vector<8x128xf32>
    %121 = arith.divf %119, %120 : vector<8x128xf32>
    %122 = vector.extract_strided_slice %111 {offsets = [0, 128], sizes = [8, 128], strides = [1, 1]} : vector<8x384xf32> to vector<8x128xf32>
    %123 = vector.extract_strided_slice %113 {offsets = [0, 128], sizes = [8, 128], strides = [1, 1]} : vector<8x384xf32> to vector<8x128xf32>
    %124 = arith.addf %122, %123 : vector<8x128xf32>
    %125 = arith.negf %124 : vector<8x128xf32>
    %126 = math.exp %125 : vector<8x128xf32>
    %cst_38 = arith.constant 1.000000e+00 : f32
    %127 = vector.broadcast %cst_38 : f32 to vector<8x128xf32>
    %128 = arith.addf %127, %126 : vector<8x128xf32>
    %129 = arith.divf %127, %128 : vector<8x128xf32>
    %130 = vector.extract_strided_slice %111 {offsets = [0, 256], sizes = [8, 128], strides = [1, 1]} : vector<8x384xf32> to vector<8x128xf32>
    %131 = vector.extract_strided_slice %113 {offsets = [0, 256], sizes = [8, 128], strides = [1, 1]} : vector<8x384xf32> to vector<8x128xf32>
    %132 = vector.broadcast %7 : vector<1x128xf32> to vector<8x128xf32>
    %133 = arith.addf %131, %132 : vector<8x128xf32>
    %134 = arith.mulf %121, %133 : vector<8x128xf32>
    %135 = arith.addf %130, %134 : vector<8x128xf32>
    %136 = math.tanh %135 : vector<8x128xf32>
    %137 = arith.subf %107, %136 : vector<8x128xf32>
    %138 = arith.mulf %129, %137 : vector<8x128xf32>
    %139 = arith.addf %136, %138 : vector<8x128xf32>
    %c3_i32 = arith.constant 3 : i32
    %140 = vector.broadcast %c3_i32 : i32 to vector<8x128xi32>
    %141 = arith.cmpi eq, %12, %140 : vector<8x128xi32>
    %142 = arith.select %141, %139, %110 : vector<8x128xi1>, vector<8x128xf32>
    %c32 = arith.constant 32 : index
    %c0_39 = arith.constant 0 : index
    %143 = vector.load %arg8[%c32, %c0_39] : memref<64x384xf32, #tpu.memory_space<vmem>>, vector<8x384xf32>
    %c0_40 = arith.constant 0 : index
    %c0_41 = arith.constant 0 : index
    %144 = vector.load %arg4[%c0_40, %c0_41] : memref<128x384xf32, #tpu.memory_space<vmem>>, vector<128x384xf32>
    %cst_42 = arith.constant dense<0.000000e+00> : vector<8x384xf32>
    %145 = tpu.matmul %139, %144, %cst_42 {dimension_numbers = #tpu.dot_dimension_numbers<[1], [0], [0], [1], [0, 0, 1, 1], [], []>} : vector<8x128xf32>, vector<128x384xf32>, vector<8x384xf32> -> vector<8x384xf32>
    %146 = vector.extract_strided_slice %143 {offsets = [0, 0], sizes = [8, 128], strides = [1, 1]} : vector<8x384xf32> to vector<8x128xf32>
    %147 = vector.extract_strided_slice %145 {offsets = [0, 0], sizes = [8, 128], strides = [1, 1]} : vector<8x384xf32> to vector<8x128xf32>
    %148 = arith.addf %146, %147 : vector<8x128xf32>
    %149 = arith.negf %148 : vector<8x128xf32>
    %150 = math.exp %149 : vector<8x128xf32>
    %cst_43 = arith.constant 1.000000e+00 : f32
    %151 = vector.broadcast %cst_43 : f32 to vector<8x128xf32>
    %152 = arith.addf %151, %150 : vector<8x128xf32>
    %153 = arith.divf %151, %152 : vector<8x128xf32>
    %154 = vector.extract_strided_slice %143 {offsets = [0, 128], sizes = [8, 128], strides = [1, 1]} : vector<8x384xf32> to vector<8x128xf32>
    %155 = vector.extract_strided_slice %145 {offsets = [0, 128], sizes = [8, 128], strides = [1, 1]} : vector<8x384xf32> to vector<8x128xf32>
    %156 = arith.addf %154, %155 : vector<8x128xf32>
    %157 = arith.negf %156 : vector<8x128xf32>
    %158 = math.exp %157 : vector<8x128xf32>
    %cst_44 = arith.constant 1.000000e+00 : f32
    %159 = vector.broadcast %cst_44 : f32 to vector<8x128xf32>
    %160 = arith.addf %159, %158 : vector<8x128xf32>
    %161 = arith.divf %159, %160 : vector<8x128xf32>
    %162 = vector.extract_strided_slice %143 {offsets = [0, 256], sizes = [8, 128], strides = [1, 1]} : vector<8x384xf32> to vector<8x128xf32>
    %163 = vector.extract_strided_slice %145 {offsets = [0, 256], sizes = [8, 128], strides = [1, 1]} : vector<8x384xf32> to vector<8x128xf32>
    %164 = vector.broadcast %7 : vector<1x128xf32> to vector<8x128xf32>
    %165 = arith.addf %163, %164 : vector<8x128xf32>
    %166 = arith.mulf %153, %165 : vector<8x128xf32>
    %167 = arith.addf %162, %166 : vector<8x128xf32>
    %168 = math.tanh %167 : vector<8x128xf32>
    %169 = arith.subf %139, %168 : vector<8x128xf32>
    %170 = arith.mulf %161, %169 : vector<8x128xf32>
    %171 = arith.addf %168, %170 : vector<8x128xf32>
    %c4_i32 = arith.constant 4 : i32
    %172 = vector.broadcast %c4_i32 : i32 to vector<8x128xi32>
    %173 = arith.cmpi eq, %12, %172 : vector<8x128xi32>
    %174 = arith.select %173, %171, %142 : vector<8x128xi1>, vector<8x128xf32>
    %c40 = arith.constant 40 : index
    %c0_45 = arith.constant 0 : index
    %175 = vector.load %arg8[%c40, %c0_45] : memref<64x384xf32, #tpu.memory_space<vmem>>, vector<8x384xf32>
    %c0_46 = arith.constant 0 : index
    %c0_47 = arith.constant 0 : index
    %176 = vector.load %arg4[%c0_46, %c0_47] : memref<128x384xf32, #tpu.memory_space<vmem>>, vector<128x384xf32>
    %cst_48 = arith.constant dense<0.000000e+00> : vector<8x384xf32>
    %177 = tpu.matmul %171, %176, %cst_48 {dimension_numbers = #tpu.dot_dimension_numbers<[1], [0], [0], [1], [0, 0, 1, 1], [], []>} : vector<8x128xf32>, vector<128x384xf32>, vector<8x384xf32> -> vector<8x384xf32>
    %178 = vector.extract_strided_slice %175 {offsets = [0, 0], sizes = [8, 128], strides = [1, 1]} : vector<8x384xf32> to vector<8x128xf32>
    %179 = vector.extract_strided_slice %177 {offsets = [0, 0], sizes = [8, 128], strides = [1, 1]} : vector<8x384xf32> to vector<8x128xf32>
    %180 = arith.addf %178, %179 : vector<8x128xf32>
    %181 = arith.negf %180 : vector<8x128xf32>
    %182 = math.exp %181 : vector<8x128xf32>
    %cst_49 = arith.constant 1.000000e+00 : f32
    %183 = vector.broadcast %cst_49 : f32 to vector<8x128xf32>
    %184 = arith.addf %183, %182 : vector<8x128xf32>
    %185 = arith.divf %183, %184 : vector<8x128xf32>
    %186 = vector.extract_strided_slice %175 {offsets = [0, 128], sizes = [8, 128], strides = [1, 1]} : vector<8x384xf32> to vector<8x128xf32>
    %187 = vector.extract_strided_slice %177 {offsets = [0, 128], sizes = [8, 128], strides = [1, 1]} : vector<8x384xf32> to vector<8x128xf32>
    %188 = arith.addf %186, %187 : vector<8x128xf32>
    %189 = arith.negf %188 : vector<8x128xf32>
    %190 = math.exp %189 : vector<8x128xf32>
    %cst_50 = arith.constant 1.000000e+00 : f32
    %191 = vector.broadcast %cst_50 : f32 to vector<8x128xf32>
    %192 = arith.addf %191, %190 : vector<8x128xf32>
    %193 = arith.divf %191, %192 : vector<8x128xf32>
    %194 = vector.extract_strided_slice %175 {offsets = [0, 256], sizes = [8, 128], strides = [1, 1]} : vector<8x384xf32> to vector<8x128xf32>
    %195 = vector.extract_strided_slice %177 {offsets = [0, 256], sizes = [8, 128], strides = [1, 1]} : vector<8x384xf32> to vector<8x128xf32>
    %196 = vector.broadcast %7 : vector<1x128xf32> to vector<8x128xf32>
    %197 = arith.addf %195, %196 : vector<8x128xf32>
    %198 = arith.mulf %185, %197 : vector<8x128xf32>
    %199 = arith.addf %194, %198 : vector<8x128xf32>
    %200 = math.tanh %199 : vector<8x128xf32>
    %201 = arith.subf %171, %200 : vector<8x128xf32>
    %202 = arith.mulf %193, %201 : vector<8x128xf32>
    %203 = arith.addf %200, %202 : vector<8x128xf32>
    %c5_i32 = arith.constant 5 : i32
    %204 = vector.broadcast %c5_i32 : i32 to vector<8x128xi32>
    %205 = arith.cmpi eq, %12, %204 : vector<8x128xi32>
    %206 = arith.select %205, %203, %174 : vector<8x128xi1>, vector<8x128xf32>
    %c48 = arith.constant 48 : index
    %c0_51 = arith.constant 0 : index
    %207 = vector.load %arg8[%c48, %c0_51] : memref<64x384xf32, #tpu.memory_space<vmem>>, vector<8x384xf32>
    %c0_52 = arith.constant 0 : index
    %c0_53 = arith.constant 0 : index
    %208 = vector.load %arg4[%c0_52, %c0_53] : memref<128x384xf32, #tpu.memory_space<vmem>>, vector<128x384xf32>
    %cst_54 = arith.constant dense<0.000000e+00> : vector<8x384xf32>
    %209 = tpu.matmul %203, %208, %cst_54 {dimension_numbers = #tpu.dot_dimension_numbers<[1], [0], [0], [1], [0, 0, 1, 1], [], []>} : vector<8x128xf32>, vector<128x384xf32>, vector<8x384xf32> -> vector<8x384xf32>
    %210 = vector.extract_strided_slice %207 {offsets = [0, 0], sizes = [8, 128], strides = [1, 1]} : vector<8x384xf32> to vector<8x128xf32>
    %211 = vector.extract_strided_slice %209 {offsets = [0, 0], sizes = [8, 128], strides = [1, 1]} : vector<8x384xf32> to vector<8x128xf32>
    %212 = arith.addf %210, %211 : vector<8x128xf32>
    %213 = arith.negf %212 : vector<8x128xf32>
    %214 = math.exp %213 : vector<8x128xf32>
    %cst_55 = arith.constant 1.000000e+00 : f32
    %215 = vector.broadcast %cst_55 : f32 to vector<8x128xf32>
    %216 = arith.addf %215, %214 : vector<8x128xf32>
    %217 = arith.divf %215, %216 : vector<8x128xf32>
    %218 = vector.extract_strided_slice %207 {offsets = [0, 128], sizes = [8, 128], strides = [1, 1]} : vector<8x384xf32> to vector<8x128xf32>
    %219 = vector.extract_strided_slice %209 {offsets = [0, 128], sizes = [8, 128], strides = [1, 1]} : vector<8x384xf32> to vector<8x128xf32>
    %220 = arith.addf %218, %219 : vector<8x128xf32>
    %221 = arith.negf %220 : vector<8x128xf32>
    %222 = math.exp %221 : vector<8x128xf32>
    %cst_56 = arith.constant 1.000000e+00 : f32
    %223 = vector.broadcast %cst_56 : f32 to vector<8x128xf32>
    %224 = arith.addf %223, %222 : vector<8x128xf32>
    %225 = arith.divf %223, %224 : vector<8x128xf32>
    %226 = vector.extract_strided_slice %207 {offsets = [0, 256], sizes = [8, 128], strides = [1, 1]} : vector<8x384xf32> to vector<8x128xf32>
    %227 = vector.extract_strided_slice %209 {offsets = [0, 256], sizes = [8, 128], strides = [1, 1]} : vector<8x384xf32> to vector<8x128xf32>
    %228 = vector.broadcast %7 : vector<1x128xf32> to vector<8x128xf32>
    %229 = arith.addf %227, %228 : vector<8x128xf32>
    %230 = arith.mulf %217, %229 : vector<8x128xf32>
    %231 = arith.addf %226, %230 : vector<8x128xf32>
    %232 = math.tanh %231 : vector<8x128xf32>
    %233 = arith.subf %203, %232 : vector<8x128xf32>
    %234 = arith.mulf %225, %233 : vector<8x128xf32>
    %235 = arith.addf %232, %234 : vector<8x128xf32>
    %c6_i32 = arith.constant 6 : i32
    %236 = vector.broadcast %c6_i32 : i32 to vector<8x128xi32>
    %237 = arith.cmpi eq, %12, %236 : vector<8x128xi32>
    %238 = arith.select %237, %235, %206 : vector<8x128xi1>, vector<8x128xf32>
    %c56 = arith.constant 56 : index
    %c0_57 = arith.constant 0 : index
    %239 = vector.load %arg8[%c56, %c0_57] : memref<64x384xf32, #tpu.memory_space<vmem>>, vector<8x384xf32>
    %c0_58 = arith.constant 0 : index
    %c0_59 = arith.constant 0 : index
    %240 = vector.load %arg4[%c0_58, %c0_59] : memref<128x384xf32, #tpu.memory_space<vmem>>, vector<128x384xf32>
    %cst_60 = arith.constant dense<0.000000e+00> : vector<8x384xf32>
    %241 = tpu.matmul %235, %240, %cst_60 {dimension_numbers = #tpu.dot_dimension_numbers<[1], [0], [0], [1], [0, 0, 1, 1], [], []>} : vector<8x128xf32>, vector<128x384xf32>, vector<8x384xf32> -> vector<8x384xf32>
    %242 = vector.extract_strided_slice %239 {offsets = [0, 0], sizes = [8, 128], strides = [1, 1]} : vector<8x384xf32> to vector<8x128xf32>
    %243 = vector.extract_strided_slice %241 {offsets = [0, 0], sizes = [8, 128], strides = [1, 1]} : vector<8x384xf32> to vector<8x128xf32>
    %244 = arith.addf %242, %243 : vector<8x128xf32>
    %245 = arith.negf %244 : vector<8x128xf32>
    %246 = math.exp %245 : vector<8x128xf32>
    %cst_61 = arith.constant 1.000000e+00 : f32
    %247 = vector.broadcast %cst_61 : f32 to vector<8x128xf32>
    %248 = arith.addf %247, %246 : vector<8x128xf32>
    %249 = arith.divf %247, %248 : vector<8x128xf32>
    %250 = vector.extract_strided_slice %239 {offsets = [0, 128], sizes = [8, 128], strides = [1, 1]} : vector<8x384xf32> to vector<8x128xf32>
    %251 = vector.extract_strided_slice %241 {offsets = [0, 128], sizes = [8, 128], strides = [1, 1]} : vector<8x384xf32> to vector<8x128xf32>
    %252 = arith.addf %250, %251 : vector<8x128xf32>
    %253 = arith.negf %252 : vector<8x128xf32>
    %254 = math.exp %253 : vector<8x128xf32>
    %cst_62 = arith.constant 1.000000e+00 : f32
    %255 = vector.broadcast %cst_62 : f32 to vector<8x128xf32>
    %256 = arith.addf %255, %254 : vector<8x128xf32>
    %257 = arith.divf %255, %256 : vector<8x128xf32>
    %258 = vector.extract_strided_slice %239 {offsets = [0, 256], sizes = [8, 128], strides = [1, 1]} : vector<8x384xf32> to vector<8x128xf32>
    %259 = vector.extract_strided_slice %241 {offsets = [0, 256], sizes = [8, 128], strides = [1, 1]} : vector<8x384xf32> to vector<8x128xf32>
    %260 = vector.broadcast %7 : vector<1x128xf32> to vector<8x128xf32>
    %261 = arith.addf %259, %260 : vector<8x128xf32>
    %262 = arith.mulf %249, %261 : vector<8x128xf32>
    %263 = arith.addf %258, %262 : vector<8x128xf32>
    %264 = math.tanh %263 : vector<8x128xf32>
    %265 = arith.subf %235, %264 : vector<8x128xf32>
    %266 = arith.mulf %257, %265 : vector<8x128xf32>
    %267 = arith.addf %264, %266 : vector<8x128xf32>
    %c7_i32 = arith.constant 7 : i32
    %268 = vector.broadcast %c7_i32 : i32 to vector<8x128xi32>
    %269 = arith.cmpi eq, %12, %268 : vector<8x128xi32>
    %270 = arith.select %269, %267, %238 : vector<8x128xi1>, vector<8x128xf32>
    %c0_63 = arith.constant 0 : index
    %c0_64 = arith.constant 0 : index
    %271 = vector.load %arg7[%c0_63, %c0_64] : memref<8x128xf32, #tpu.memory_space<vmem>>, vector<8x128xf32>
    tpu.vector_store %arg7[%c0_63, %c0_64], %270 {strides = array<i32>} : memref<8x128xf32, #tpu.memory_space<vmem>>, vector<8x128xf32>,
    return
  }
  func.func @transform_0(%arg0: i32) -> (i32, i32) {
    %c0_i32 = arith.constant 0 : i32
    %c0_i32_0 = arith.constant 0 : i32
    return %arg0, %c0_i32 : i32, i32
  }
  func.func @transform_1(%arg0: i32) -> (i32, i32) {
    %c0_i32 = arith.constant 0 : i32
    %c0_i32_0 = arith.constant 0 : i32
    return %arg0, %c0_i32 : i32, i32
  }
  func.func @transform_2(%arg0: i32) -> (i32, i32) {
    %c0_i32 = arith.constant 0 : i32
    %c0_i32_0 = arith.constant 0 : i32
    %c0_i32_1 = arith.constant 0 : i32
    return %c0_i32, %c0_i32_0 : i32, i32
  }
  func.func @transform_3(%arg0: i32) -> (i32, i32) {
    %c0_i32 = arith.constant 0 : i32
    %c0_i32_0 = arith.constant 0 : i32
    %c0_i32_1 = arith.constant 0 : i32
    return %c0_i32, %c0_i32_0 : i32, i32
  }
  func.func @transform_4(%arg0: i32) -> (i32, i32) {
    %c0_i32 = arith.constant 0 : i32
    %c0_i32_0 = arith.constant 0 : i32
    %c0_i32_1 = arith.constant 0 : i32
    return %c0_i32, %c0_i32_0 : i32, i32
  }
  func.func @transform_5(%arg0: i32) -> (i32, i32) {
    %c0_i32 = arith.constant 0 : i32
    %c0_i32_0 = arith.constant 0 : i32
    %c0_i32_1 = arith.constant 0 : i32
    return %c0_i32, %c0_i32_0 : i32, i32
  }
  func.func @transform_6(%arg0: i32) -> (i32, i32) {
    %c0_i32 = arith.constant 0 : i32
    %c0_i32_0 = arith.constant 0 : i32
    return %arg0, %c0_i32 : i32, i32
  }
}

</mosaic_0001>

<llo_original>
// kernel: seq_encoder_forward.1
$region0: #{seq_encoder_forward.1}
  #allocation0 [shape = 'u32[]', space=smem, size = 0x4, offset = 0x4, fixed_abs, tag = 'smem constant byte address 0x4 - core index']
  #allocation1 [shape = 'u32[144,128]{1,0:T(1,128)}', space=vmem, size = 0x12000, scoped, tag = 'internal scratch']
  #allocation2 [shape = 'f32[64,384]{1,0:T(8,128)}', space=vmem, size = 0x18000, scoped, tag = 'scratch operand']
  %s0 = inlined_call_operand.vmem [shape: s32[8,1], index: 0, kind: input, shape index: {}]
  %s1 = inlined_call_operand.vmem [shape: bf16[64,16], index: 1, kind: input, shape index: {}]
  %s2 = inlined_call_operand.hbm [shape: bf16[16,384], index: 2, kind: input, shape index: {}]
  %s3 = inlined_call_operand.vmem [shape: f32[128,384], index: 3, kind: input, shape index: {}]
  %s4 = inlined_call_operand.vmem [shape: f32[1,384], index: 4, kind: input, shape index: {}]
  %s5 = inlined_call_operand.hbm [shape: f32[1,128], index: 5, kind: input, shape index: {}]
  %s6 = inlined_call_operand.vmem [shape: f32[8,128], index: 6, kind: output, shape index: {}]
  %s7 = sld [smem:[#allocation0]]
  $region42: #{seq_encoder_forward.1} parent=0
    _
  %s9 = ssub.s32 1, %s7
  %s10 = scalar_select 0, %s9, %s7
  $region1: #{seq_encoder_forward.1} parent=0
    #allocation3 [shape = 'u8[12288]{0}', space=vmem, size = 0x3000, scoped, tag = 'input window, operand 2, single buffered']
    #allocation4 [shape = 's32[1]{0}', space=sflag, size = 0x4, scoped, tag = 'scoped memory for seq_encoder_forward.1']
    #allocation5 [shape = 'u8[512]{0}', space=vmem, size = 0x400, scoped, tag = 'input window, operand 5, single buffered']
    #allocation6 [shape = 's32[1]{0}', space=sflag, size = 0x4, scoped, tag = 'scoped memory for seq_encoder_forward.1']
    %11 = vsyncpa [#allocation4], 0
    %12 = vsyncpa [#allocation6], 0
    // Predicated region
    $region2: #{seq_encoder_forward.1} parent=1 // pred_check
      _
    $region3: #{seq_encoder_forward.1} parent=1 // pred_check_branch
      %14 = sbr.rel (0) target = $region5
    $region4: #{seq_encoder_forward.1} parent=1 // pred_region
      _
    $region5: #{seq_encoder_forward.1} parent=1 // pred_fallthru
      _
    // Predicated region
    $region6: #{seq_encoder_forward.1} parent=1 // pred_check
      _
    $region7: #{seq_encoder_forward.1} parent=1 // pred_check_branch
      %16 = sbr.rel (0) target = $region9
    $region8: #{seq_encoder_forward.1} parent=1 // pred_region
      _
    $region9: #{seq_encoder_forward.1} parent=1 // pred_fallthru
      _
    // Predicated region
    $region10: #{seq_encoder_forward.1} parent=1 // pred_check
      _
    $region11: #{seq_encoder_forward.1} parent=1 // pred_check_branch
      %18 = sbr.rel (0) target = $region13
    $region12: #{seq_encoder_forward.1} parent=1 // pred_region
      %s20 = ssub.s32 384, 384
      %21 = vsyncadd [#allocation4], %s20
      %s22 = sshll.u32 [#allocation3], 4
      %s23 = int_to_ptr.vmem [resolvable:$true] %s22
      %28 = dma.hbm_to_vmem [thread:$0]  %s2, 384, %s23, [#allocation4], 192, 192, 12
    $region13: #{seq_encoder_forward.1} parent=1 // pred_fallthru
      _
    // Predicated region
    $region14: #{seq_encoder_forward.1} parent=1 // pred_check
      _
    $region15: #{seq_encoder_forward.1} parent=1 // pred_check_branch
      %30 = sbr.rel (0) target = $region17
    $region16: #{seq_encoder_forward.1} parent=1 // pred_region
      _
    $region17: #{seq_encoder_forward.1} parent=1 // pred_fallthru
      _
    // Predicated region
    $region18: #{seq_encoder_forward.1} parent=1 // pred_check
      _
    $region19: #{seq_encoder_forward.1} parent=1 // pred_check_branch
      %32 = sbr.rel (0) target = $region21
    $region20: #{seq_encoder_forward.1} parent=1 // pred_region
      _
    $region21: #{seq_encoder_forward.1} parent=1 // pred_fallthru
      _
    // Predicated region
    $region22: #{seq_encoder_forward.1} parent=1 // pred_check
      _
    $region23: #{seq_encoder_forward.1} parent=1 // pred_check_branch
      %34 = sbr.rel (0) target = $region25
    $region24: #{seq_encoder_forward.1} parent=1 // pred_region
      %s36 = ssub.s32 16, 16
      %37 = vsyncadd [#allocation6], %s36
      %s39 = sshll.u32 [#allocation5], 4
      %s40 = int_to_ptr.vmem [resolvable:$true] %s39
      %42 = dma.hbm_to_vmem [thread:$0]  %s5, 16, %s40, [#allocation6]
    $region25: #{seq_encoder_forward.1} parent=1 // pred_fallthru
      _
    // Predicated region
    $region26: #{seq_encoder_forward.1} parent=1 // pred_check
      _
    $region27: #{seq_encoder_forward.1} parent=1 // pred_check_branch
      %44 = sbr.rel (0) target = $region29
    $region28: #{seq_encoder_forward.1} parent=1 // pred_region
      %45 = dma.done [#allocation4], 384
    $region29: #{seq_encoder_forward.1} parent=1 // pred_fallthru
      _
    // Predicated region
    $region30: #{seq_encoder_forward.1} parent=1 // pred_check
      _
    $region31: #{seq_encoder_forward.1} parent=1 // pred_check_branch
      %47 = sbr.rel (0) target = $region33
    $region32: #{seq_encoder_forward.1} parent=1 // pred_region
      %48 = dma.done [#allocation6], 16
    $region33: #{seq_encoder_forward.1} parent=1 // pred_fallthru
      _
    %v50 = vld [vmem:[%s1] sm:$0xf]
    %v51 = vld [vmem:[%s1 + $0x4] sm:$0xf]
    %v52 = vld [vmem:[%s1 + $0x8] sm:$0xf]
    %v53 = vld [vmem:[%s1 + $0xc] sm:$0xf]
    %v54 = vld [vmem:[%s1 + $0x10] sm:$0xf]
    %v55 = vld [vmem:[%s1 + $0x14] sm:$0xf]
    %v56 = vld [vmem:[%s1 + $0x18] sm:$0xf]
    %v57 = vld [vmem:[%s1 + $0x1c] sm:$0xf]
    %v58 = vld [vmem:[#allocation3] sm:$0xff]
    %v59 = vld [vmem:[#allocation3 + $0x8] sm:$0xf]
    %v60 = vld [vmem:[#allocation3 + $0xc] sm:$0xff]
    %v61 = vld [vmem:[#allocation3 + $0x14] sm:$0xf]
    %v62 = vld [vmem:[%s4] sm:$0x7]
    %v64 = vlaneseq
    %v65 = vshrl.u32 %v64, 7
    %v66 = vsub.s32 0, %v65
    %v67 = vrot.slane %v62, %v66
    %v68 = vlaneseq
    %v69 = vshrl.u32 %v68, 7
    %v70 = vsub.s32 1, %v69
    %v71 = vrot.slane %v62, %v70
    %v72 = vlaneseq
    %v73 = vshrl.u32 %v72, 7
    %v74 = vsub.s32 2, %v73
    %v75 = vrot.slane %v62, %v74
    %v87 = vunpack.c.l.b16 %v50
    %v88 = vunpack.c.l.b16 %v51
    %v89 = vunpack.c.l.b16 %v52
    %v90 = vunpack.c.l.b16 %v53
    %v91 = vunpack.c.l.b16 %v54
    %v92 = vunpack.c.l.b16 %v55
    %v93 = vunpack.c.l.b16 %v56
    %v94 = vunpack.c.l.b16 %v57
    %v95 = vpack.c.b16 %v88, %v87
    %v96 = vpack.c.b16 %v90, %v89
    %v97 = vpack.c.b16 %v92, %v91
    %v98 = vpack.c.b16 %v94, %v93
    %v103 = vunpack.c.l.b16 %v58
    %v104 = vunpack.c.h.b16 %v58
    %v105 = vunpack.c.l.b16 %v59
    %v106 = vunpack.c.l.b16 %v60
    %v107 = vunpack.c.h.b16 %v60
    %v108 = vunpack.c.l.b16 %v61
    %v109 = vpack.c.b16 %v106, %v103
    %v110 = vpack.c.b16 %v107, %v104
    %v111 = vpack.c.b16 %v108, %v105
    %vm115 = vcmask 130048
    %v117 = vsel %vm115, %v95, 0
    %v120 = vsel %vm115, %v96, 0
    %v123 = vsel %vm115, %v97, 0
    %v126 = vsel %vm115, %v98, 0
    %128 = vmatprep.subr.bf16.mxu0 0
    %129 = vmatpush1.bf16.msra.mxu0 0
    %130 = vmatprep.subr.bf16.mxu0 0
    %131 = vmatpush1.bf16.msra.mxu0 0
    %132 = vmatprep.subr.bf16.mxu0 0
    %133 = vmatpush1.bf16.msra.mxu0 0
    %134 = vmatprep.subr.bf16.mxu0 0
    %135 = vmatpush1.bf16.msra.mxu0 0
    %136 = vmatprep.subr.bf16.mxu0 0
    %137 = vmatpush1.bf16.msra.mxu0 0
    %138 = vmatprep.subr.bf16.mxu0 0
    %139 = vmatpush1.bf16.msra.mxu0 0
    %140 = vmatprep.subr.bf16.mxu0 0
    %141 = vmatpush1.bf16.msra.mxu0 0
    %142 = vmatprep.subr.bf16.mxu0 %v110
    %143 = vmatpush1.bf16.msra.mxu0 %v109
    %144 = vmatprep.subr.bf16.mxu0 0
    %145 = vmatpush2.bf16.msra.mxu0 0
    %146 = vmatprep.subr.bf16.mxu0 0
    %147 = vmatpush2.bf16.msra.mxu0 0
    %148 = vmatprep.subr.bf16.mxu0 0
    %149 = vmatpush2.bf16.msra.mxu0 0
    %150 = vmatprep.subr.bf16.mxu0 0
    %151 = vmatpush2.bf16.msra.mxu0 0
    %152 = vmatprep.subr.bf16.mxu0 0
    %153 = vmatpush2.bf16.msra.mxu0 0
    %154 = vmatprep.subr.bf16.mxu0 0
    %155 = vmatpush2.bf16.msra.mxu0 0
    %156 = vmatprep.subr.bf16.mxu0 0
    %157 = vmatpush2.bf16.msra.mxu0 0
    %158 = vmatprep.subr.bf16.mxu0 0
    %159 = vmatpush2.bf16.msra.mxu0 0
    %160 = vmatprep.mubr.bf16.mxu0 0
    %161 = vmatmul.mubr.bf16.gmra.mxu0 %v117
    %v162 = vpop.f32.mrf.mxu0
    %v163 = vadd.f32 %v67, %v162
    %v164 = vpop.f32.mrf.mxu0
    %v165 = vadd.f32 %v71, %v164
    %v166 = vpop.f32.mrf.mxu0
    %v167 = vadd.f32 %v67, %v166
    %v168 = vpop.f32.mrf.mxu0
    %v169 = vadd.f32 %v71, %v168
    %170 = vmatprep.mubr.bf16.mxu0 0
    %171 = vmatmul.mubr.bf16.gmra.mxu0 %v120
    %v172 = vpop.f32.mrf.mxu0
    %v173 = vadd.f32 %v67, %v172
    %v174 = vpop.f32.mrf.mxu0
    %v175 = vadd.f32 %v71, %v174
    %v176 = vpop.f32.mrf.mxu0
    %v177 = vadd.f32 %v67, %v176
    %v178 = vpop.f32.mrf.mxu0
    %v179 = vadd.f32 %v71, %v178
    %180 = vmatprep.mubr.bf16.mxu0 0
    %181 = vmatmul.mubr.bf16.gmra.mxu0 %v123
    %v182 = vpop.f32.mrf.mxu0
    %v183 = vadd.f32 %v67, %v182
    %v184 = vpop.f32.mrf.mxu0
    %v185 = vadd.f32 %v71, %v184
    %v186 = vpop.f32.mrf.mxu0
    %v187 = vadd.f32 %v67, %v186
    %v188 = vpop.f32.mrf.mxu0
    %v189 = vadd.f32 %v71, %v188
    %190 = vmatprep.mubr.bf16.mxu0 0
    %191 = vmatmul.mubr.bf16.gmra.mxu0 %v126
    %v192 = vpop.f32.mrf.mxu0
    %v193 = vadd.f32 %v67, %v192
    %v194 = vpop.f32.mrf.mxu0
    %v195 = vadd.f32 %v71, %v194
    %v196 = vpop.f32.mrf.mxu0
    %v197 = vadd.f32 %v67, %v196
    %v198 = vpop.f32.mrf.mxu0
    %v199 = vadd.f32 %v71, %v198
    %200 = vdwg.mxu0
    %201 = vmatprep.subr.bf16.mxu0 0
    %202 = vmatpush1.bf16.msra.mxu0 0
    %203 = vmatprep.subr.bf16.mxu0 0
    %204 = vmatpush1.bf16.msra.mxu0 0
    %205 = vmatprep.subr.bf16.mxu0 0
    %206 = vmatpush1.bf16.msra.mxu0 0
    %207 = vmatprep.subr.bf16.mxu0 0
    %208 = vmatpush1.bf16.msra.mxu0 0
    %209 = vmatprep.subr.bf16.mxu0 0
    %210 = vmatpush1.bf16.msra.mxu0 0
    %211 = vmatprep.subr.bf16.mxu0 0
    %212 = vmatpush1.bf16.msra.mxu0 0
    %213 = vmatprep.subr.bf16.mxu0 0
    %214 = vmatpush1.bf16.msra.mxu0 0
    %215 = vmatprep.subr.bf16.mxu0 0
    %216 = vmatpush1.bf16.msra.mxu0 %v111
    %217 = vmatprep.subr.bf16.mxu0 0
    %218 = vmatpush2.bf16.msra.mxu0 0
    %219 = vmatprep.subr.bf16.mxu0 0
    %220 = vmatpush2.bf16.msra.mxu0 0
    %221 = vmatprep.subr.bf16.mxu0 0
    %222 = vmatpush2.bf16.msra.mxu0 0
    %223 = vmatprep.subr.bf16.mxu0 0
    %224 = vmatpush2.bf16.msra.mxu0 0
    %225 = vmatprep.subr.bf16.mxu0 0
    %226 = vmatpush2.bf16.msra.mxu0 0
    %227 = vmatprep.subr.bf16.mxu0 0
    %228 = vmatpush2.bf16.msra.mxu0 0
    %229 = vmatprep.subr.bf16.mxu0 0
    %230 = vmatpush2.bf16.msra.mxu0 0
    %231 = vmatprep.subr.bf16.mxu0 0
    %232 = vmatpush2.bf16.msra.mxu0 0
    %233 = vmatprep.mubr.bf16.mxu0 0
    %234 = vmatmul.mubr.bf16.gmra.mxu0 %v117
    %v235 = vpop.f32.mrf.mxu0
    %v236 = vadd.f32 %v75, %v235
    %v237 = vpop.f32.mrf.mxu0
    %v238 = vpop.f32.mrf.mxu0
    %v239 = vadd.f32 %v75, %v238
    %v240 = vpop.f32.mrf.mxu0
    %241 = vmatprep.mubr.bf16.mxu0 0
    %242 = vmatmul.mubr.bf16.gmra.mxu0 %v120
    %v243 = vpop.f32.mrf.mxu0
    %v244 = vadd.f32 %v75, %v243
    %v245 = vpop.f32.mrf.mxu0
    %v246 = vpop.f32.mrf.mxu0
    %v247 = vadd.f32 %v75, %v246
    %v248 = vpop.f32.mrf.mxu0
    %249 = vmatprep.mubr.bf16.mxu0 0
    %250 = vmatmul.mubr.bf16.gmra.mxu0 %v123
    %v251 = vpop.f32.mrf.mxu0
    %v252 = vadd.f32 %v75, %v251
    %v253 = vpop.f32.mrf.mxu0
    %v254 = vpop.f32.mrf.mxu0
    %v255 = vadd.f32 %v75, %v254
    %v256 = vpop.f32.mrf.mxu0
    %257 = vmatprep.mubr.bf16.mxu0 0
    %258 = vmatmul.mubr.bf16.gmra.mxu0 %v126
    %v259 = vpop.f32.mrf.mxu0
    %v260 = vadd.f32 %v75, %v259
    %v261 = vpop.f32.mrf.mxu0
    %v262 = vpop.f32.mrf.mxu0
    %v263 = vadd.f32 %v75, %v262
    %v264 = vpop.f32.mrf.mxu0
    %265 = vdwg.mxu0
    %266 = vst [vmem:[#allocation2] sm:$0xff] %v163
    %267 = vst [vmem:[#allocation2 + $0x8] sm:$0xff] %v165
    %268 = vst [vmem:[#allocation2 + $0x10] sm:$0xff] %v236
    %269 = vst [vmem:[#allocation2 + $0x18] sm:$0xff] %v167
    %270 = vst [vmem:[#allocation2 + $0x20] sm:$0xff] %v169
    %271 = vst [vmem:[#allocation2 + $0x28] sm:$0xff] %v239
    %272 = vst [vmem:[#allocation2 + $0x30] sm:$0xff] %v173
    %273 = vst [vmem:[#allocation2 + $0x38] sm:$0xff] %v175
    %274 = vst [vmem:[#allocation2 + $0x40] sm:$0xff] %v244
    %275 = vst [vmem:[#allocation2 + $0x48] sm:$0xff] %v177
    %276 = vst [vmem:[#allocation2 + $0x50] sm:$0xff] %v179
    %277 = vst [vmem:[#allocation2 + $0x58] sm:$0xff] %v247
    %278 = vst [vmem:[#allocation2 + $0x60] sm:$0xff] %v183
    %279 = vst [vmem:[#allocation2 + $0x68] sm:$0xff] %v185
    %280 = vst [vmem:[#allocation2 + $0x70] sm:$0xff] %v252
    %281 = vst [vmem:[#allocation2 + $0x78] sm:$0xff] %v187
    %282 = vst [vmem:[#allocation2 + $0x80] sm:$0xff] %v189
    %283 = vst [vmem:[#allocation2 + $0x88] sm:$0xff] %v255
    %284 = vst [vmem:[#allocation2 + $0x90] sm:$0xff] %v193
    %285 = vst [vmem:[#allocation2 + $0x98] sm:$0xff] %v195
    %286 = vst [vmem:[#allocation2 + $0xa0] sm:$0xff] %v260
    %287 = vst [vmem:[#allocation2 + $0xa8] sm:$0xff] %v197
    %288 = vst [vmem:[#allocation2 + $0xb0] sm:$0xff] %v199
    %289 = vst [vmem:[#allocation2 + $0xb8] sm:$0xff] %v263
    %v290 = vld [vmem:[#allocation5] sm:$0x1]
    %v291 = vld [vmem:[%s0] sm:$0xff]
    %v292 = vsub.s32 %v291, 1
    %293 = vset.pattern.permute.xlu0 0
    %294 = vperm.xlu0 %293, %v292
    %v295 = vpop.permute.xlu0 %294
    %v296 = vld [vmem:[#allocation2] sm:$0xff]
    %v297 = vld [vmem:[#allocation2 + $0x8] sm:$0xff]
    %v298 = vld [vmem:[#allocation2 + $0x10] sm:$0xff]
    %v299 = vld [vmem:[%s3] sm:$0xff]
    %v300 = vld [vmem:[%s3 + $0x8] sm:$0xff]
    %v301 = vld [vmem:[%s3 + $0x10] sm:$0xff]
    %v302 = vld [vmem:[%s3 + $0x18] sm:$0xff]
    %v303 = vld [vmem:[%s3 + $0x20] sm:$0xff]
    %v304 = vld [vmem:[%s3 + $0x28] sm:$0xff]
    %v305 = vld [vmem:[%s3 + $0x30] sm:$0xff]
    %v306 = vld [vmem:[%s3 + $0x38] sm:$0xff]
    %v307 = vld [vmem:[%s3 + $0x40] sm:$0xff]
    %v308 = vld [vmem:[%s3 + $0x48] sm:$0xff]
    %v309 = vld [vmem:[%s3 + $0x50] sm:$0xff]
    %v310 = vld [vmem:[%s3 + $0x58] sm:$0xff]
    %v311 = vld [vmem:[%s3 + $0x60] sm:$0xff]
    %v312 = vld [vmem:[%s3 + $0x68] sm:$0xff]
    %v313 = vld [vmem:[%s3 + $0x70] sm:$0xff]
    %v314 = vld [vmem:[%s3 + $0x78] sm:$0xff]
    %v315 = vld [vmem:[%s3 + $0x80] sm:$0xff]
    %v316 = vld [vmem:[%s3 + $0x88] sm:$0xff]
    %v317 = vld [vmem:[%s3 + $0x90] sm:$0xff]
    %v318 = vld [vmem:[%s3 + $0x98] sm:$0xff]
    %v319 = vld [vmem:[%s3 + $0xa0] sm:$0xff]
    %v320 = vld [vmem:[%s3 + $0xa8] sm:$0xff]
    %v321 = vld [vmem:[%s3 + $0xb0] sm:$0xff]
    %v322 = vld [vmem:[%s3 + $0xb8] sm:$0xff]
    %v323 = vld [vmem:[%s3 + $0xc0] sm:$0xff]
    %v324 = vld [vmem:[%s3 + $0xc8] sm:$0xff]
    %v325 = vld [vmem:[%s3 + $0xd0] sm:$0xff]
    %v326 = vld [vmem:[%s3 + $0xd8] sm:$0xff]
    %v327 = vld [vmem:[%s3 + $0xe0] sm:$0xff]
    %v328 = vld [vmem:[%s3 + $0xe8] sm:$0xff]
    %v329 = vld [vmem:[%s3 + $0xf0] sm:$0xff]
    %v330 = vld [vmem:[%s3 + $0xf8] sm:$0xff]
    %v331 = vld [vmem:[%s3 + $0x100] sm:$0xff]
    %v332 = vld [vmem:[%s3 + $0x108] sm:$0xff]
    %v333 = vld [vmem:[%s3 + $0x110] sm:$0xff]
    %v334 = vld [vmem:[%s3 + $0x118] sm:$0xff]
    %v335 = vld [vmem:[%s3 + $0x120] sm:$0xff]
    %v336 = vld [vmem:[%s3 + $0x128] sm:$0xff]
    %v337 = vld [vmem:[%s3 + $0x130] sm:$0xff]
    %v338 = vld [vmem:[%s3 + $0x138] sm:$0xff]
    %v339 = vld [vmem:[%s3 + $0x140] sm:$0xff]
    %v340 = vld [vmem:[%s3 + $0x148] sm:$0xff]
    %v341 = vld [vmem:[%s3 + $0x150] sm:$0xff]
    %v342 = vld [vmem:[%s3 + $0x158] sm:$0xff]
    %v343 = vld [vmem:[%s3 + $0x160] sm:$0xff]
    %v344 = vld [vmem:[%s3 + $0x168] sm:$0xff]
    %v345 = vld [vmem:[%s3 + $0x170] sm:$0xff]
    %v346 = vld [vmem:[%s3 + $0x178] sm:$0xff]
    %347 = vmatprep.subr.mxu0 %v345
    %348 = vmatpush1.msra.mxu0 %v344
    %349 = vmatprep.subr.mxu0 %v342
    %350 = vmatpush1.msra.mxu0 %v341
    %351 = vmatprep.subr.mxu0 %v339
    %352 = vmatpush1.msra.mxu0 %v338
    %353 = vmatprep.subr.mxu0 %v336
    %354 = vmatpush1.msra.mxu0 %v335
    %355 = vmatprep.subr.mxu0 %v333
    %356 = vmatpush1.msra.mxu0 %v332
    %357 = vmatprep.subr.mxu0 %v330
    %358 = vmatpush1.msra.mxu0 %v329
    %359 = vmatprep.subr.mxu0 %v327
    %360 = vmatpush1.msra.mxu0 %v326
    %361 = vmatprep.subr.mxu0 %v324
    %362 = vmatpush1.msra.mxu0 %v323
    %363 = vmatprep.subr.mxu0 %v321
    %364 = vmatpush1.msra.mxu0 %v320
    %365 = vmatprep.subr.mxu0 %v318
    %366 = vmatpush1.msra.mxu0 %v317
    %367 = vmatprep.subr.mxu0 %v315
    %368 = vmatpush1.msra.mxu0 %v314
    %369 = vmatprep.subr.mxu0 %v312
    %370 = vmatpush1.msra.mxu0 %v311
    %371 = vmatprep.subr.mxu0 %v309
    %372 = vmatpush1.msra.mxu0 %v308
    %373 = vmatprep.subr.mxu0 %v306
    %374 = vmatpush1.msra.mxu0 %v305
    %375 = vmatprep.subr.mxu0 %v303
    %376 = vmatpush1.msra.mxu0 %v302
    %377 = vmatprep.subr.mxu0 %v300
    %378 = vmatpush1.msra.mxu0 %v299
    %379 = vmatprep.subr.mxu0 0.0
    %380 = vmatpush2.msra.mxu0 0.0
    %381 = vmatprep.subr.mxu0 0.0
    %382 = vmatpush2.msra.mxu0 0.0
    %383 = vmatprep.subr.mxu0 0.0
    %384 = vmatpush2.msra.mxu0 0.0
    %385 = vmatprep.subr.mxu0 0.0
    %386 = vmatpush2.msra.mxu0 0.0
    %387 = vmatprep.subr.mxu0 0.0
    %388 = vmatpush2.msra.mxu0 0.0
    %389 = vmatprep.subr.mxu0 0.0
    %390 = vmatpush2.msra.mxu0 0.0
    %391 = vmatprep.subr.mxu0 0.0
    %392 = vmatpush2.msra.mxu0 0.0
    %393 = vmatprep.subr.mxu0 0.0
    %394 = vmatpush2.msra.mxu0 0.0
    %395 = vmatprep.subr.mxu0 0.0
    %396 = vmatpush2.msra.mxu0 0.0
    %397 = vmatprep.subr.mxu0 0.0
    %398 = vmatpush2.msra.mxu0 0.0
    %399 = vmatprep.subr.mxu0 0.0
    %400 = vmatpush2.msra.mxu0 0.0
    %401 = vmatprep.subr.mxu0 0.0
    %402 = vmatpush2.msra.mxu0 0.0
    %403 = vmatprep.subr.mxu0 0.0
    %404 = vmatpush2.msra.mxu0 0.0
    %405 = vmatprep.subr.mxu0 0.0
    %406 = vmatpush2.msra.mxu0 0.0
    %407 = vmatprep.subr.mxu0 0.0
    %408 = vmatpush2.msra.mxu0 0.0
    %409 = vmatprep.subr.mxu0 0.0
    %410 = vmatpush2.msra.mxu0 0.0
    %411 = vmatprep.mubr.f32.mxu0 0.0
    %412 = vmatmul.mubr.f32.gmra.mxu0 0.0
    %v413 = vpop.f32.mrf.mxu0
    %v414 = vadd.f32 0.0, %v413
    %v415 = vpop.f32.mrf.mxu0
    %v416 = vadd.f32 0.0, %v415
    %417 = vdwg.mxu0
    %418 = vmatprep.subr.mxu0 0.0
    %419 = vmatpush1.msra.mxu0 %v346
    %420 = vmatprep.subr.mxu0 0.0
    %421 = vmatpush1.msra.mxu0 %v343
    %422 = vmatprep.subr.mxu0 0.0
    %423 = vmatpush1.msra.mxu0 %v340
    %424 = vmatprep.subr.mxu0 0.0
    %425 = vmatpush1.msra.mxu0 %v337
    %426 = vmatprep.subr.mxu0 0.0
    %427 = vmatpush1.msra.mxu0 %v334
    %428 = vmatprep.subr.mxu0 0.0
    %429 = vmatpush1.msra.mxu0 %v331
    %430 = vmatprep.subr.mxu0 0.0
    %431 = vmatpush1.msra.mxu0 %v328
    %432 = vmatprep.subr.mxu0 0.0
    %433 = vmatpush1.msra.mxu0 %v325
    %434 = vmatprep.subr.mxu0 0.0
    %435 = vmatpush1.msra.mxu0 %v322
    %436 = vmatprep.subr.mxu0 0.0
    %437 = vmatpush1.msra.mxu0 %v319
    %438 = vmatprep.subr.mxu0 0.0
    %439 = vmatpush1.msra.mxu0 %v316
    %440 = vmatprep.subr.mxu0 0.0
    %441 = vmatpush1.msra.mxu0 %v313
    %442 = vmatprep.subr.mxu0 0.0
    %443 = vmatpush1.msra.mxu0 %v310
    %444 = vmatprep.subr.mxu0 0.0
    %445 = vmatpush1.msra.mxu0 %v307
    %446 = vmatprep.subr.mxu0 0.0
    %447 = vmatpush1.msra.mxu0 %v304
    %448 = vmatprep.subr.mxu0 0.0
    %449 = vmatpush1.msra.mxu0 %v301
    %450 = vmatprep.subr.mxu0 0.0
    %451 = vmatpush2.msra.mxu0 0.0
    %452 = vmatprep.subr.mxu0 0.0
    %453 = vmatpush2.msra.mxu0 0.0
    %454 = vmatprep.subr.mxu0 0.0
    %455 = vmatpush2.msra.mxu0 0.0
    %456 = vmatprep.subr.mxu0 0.0
    %457 = vmatpush2.msra.mxu0 0.0
    %458 = vmatprep.subr.mxu0 0.0
    %459 = vmatpush2.msra.mxu0 0.0
    %460 = vmatprep.subr.mxu0 0.0
    %461 = vmatpush2.msra.mxu0 0.0
    %462 = vmatprep.subr.mxu0 0.0
    %463 = vmatpush2.msra.mxu0 0.0
    %464 = vmatprep.subr.mxu0 0.0
    %465 = vmatpush2.msra.mxu0 0.0
    %466 = vmatprep.subr.mxu0 0.0
    %467 = vmatpush2.msra.mxu0 0.0
    %468 = vmatprep.subr.mxu0 0.0
    %469 = vmatpush2.msra.mxu0 0.0
    %470 = vmatprep.subr.mxu0 0.0
    %471 = vmatpush2.msra.mxu0 0.0
    %472 = vmatprep.subr.mxu0 0.0
    %473 = vmatpush2.msra.mxu0 0.0
    %474 = vmatprep.subr.mxu0 0.0
    %475 = vmatpush2.msra.mxu0 0.0
    %476 = vmatprep.subr.mxu0 0.0
    %477 = vmatpush2.msra.mxu0 0.0
    %478 = vmatprep.subr.mxu0 0.0
    %479 = vmatpush2.msra.mxu0 0.0
    %480 = vmatprep.subr.mxu0 0.0
    %481 = vmatpush2.msra.mxu0 0.0
    %482 = vmatprep.mubr.f32.mxu0 0.0
    %483 = vmatmul.mubr.f32.gmra.mxu0 0.0
    %v484 = vpop.f32.mrf.mxu0
    %v485 = vadd.f32 0.0, %v484
    %v486 = vpop.f32.mrf.mxu0
    %487 = vdwg.mxu0
    %v488 = vadd.f32 %v296, %v414
    %v489 = vxor.u32 %v488, 2147483648
    %v490 = vmul.f32 %v489, 1.442695
    %v491 = vpow.pop %v490
    %v492 = vadd.f32 %v491, 1.0
    %v493 = vrcp.pop %v492
    %v494 = vmul.f32 1.0, %v493
    %v495 = vadd.f32 %v297, %v416
    %v496 = vxor.u32 %v495, 2147483648
    %v497 = vmul.f32 %v496, 1.442695
    %v498 = vpow.pop %v497
    %v499 = vadd.f32 %v498, 1.0
    %v500 = vrcp.pop %v499
    %v501 = vmul.f32 1.0, %v500
    %v503 = vlaneseq
    %v504 = vshrl.u32 %v503, 7
    %v505 = vsub.s32 0, %v504
    %v506 = vrot.slane %v290, %v505
    %v508 = vadd.f32 %v485, %v506
    %v509 = vmul.f32 %v494, %v508
    %v510 = vadd.f32 %v298, %v509
    %v511 = vtanh.pop %v510
    %v512 = vsub.f32 0.0, %v511
    %v513 = vmul.f32 %v501, %v512
    %v514 = vadd.f32 %v511, %v513
    %vm515 = vcmp.eq.s32.totalorder %v295, 0
    %v516 = vsel %vm515, %v514, 0.0
    %v517 = vld [vmem:[#allocation2 + $0x18] sm:$0xff]
    %v518 = vld [vmem:[#allocation2 + $0x20] sm:$0xff]
    %v519 = vld [vmem:[#allocation2 + $0x28] sm:$0xff]
    %520 = vmatprep.subr.mxu0 %v345
    %521 = vmatpush1.msra.mxu0 %v344
    %522 = vmatprep.subr.mxu0 %v342
    %523 = vmatpush1.msra.mxu0 %v341
    %524 = vmatprep.subr.mxu0 %v339
    %525 = vmatpush1.msra.mxu0 %v338
    %526 = vmatprep.subr.mxu0 %v336
    %527 = vmatpush1.msra.mxu0 %v335
    %528 = vmatprep.subr.mxu0 %v333
    %529 = vmatpush1.msra.mxu0 %v332
    %530 = vmatprep.subr.mxu0 %v330
    %531 = vmatpush1.msra.mxu0 %v329
    %532 = vmatprep.subr.mxu0 %v327
    %533 = vmatpush1.msra.mxu0 %v326
    %534 = vmatprep.subr.mxu0 %v324
    %535 = vmatpush1.msra.mxu0 %v323
    %536 = vmatprep.subr.mxu0 %v321
    %537 = vmatpush1.msra.mxu0 %v320
    %538 = vmatprep.subr.mxu0 %v318
    %539 = vmatpush1.msra.mxu0 %v317
    %540 = vmatprep.subr.mxu0 %v315
    %541 = vmatpush1.msra.mxu0 %v314
    %542 = vmatprep.subr.mxu0 %v312
    %543 = vmatpush1.msra.mxu0 %v311
    %544 = vmatprep.subr.mxu0 %v309
    %545 = vmatpush1.msra.mxu0 %v308
    %546 = vmatprep.subr.mxu0 %v306
    %547 = vmatpush1.msra.mxu0 %v305
    %548 = vmatprep.subr.mxu0 %v303
    %549 = vmatpush1.msra.mxu0 %v302
    %550 = vmatprep.subr.mxu0 %v300
    %551 = vmatpush1.msra.mxu0 %v299
    %552 = vmatprep.subr.mxu0 0.0
    %553 = vmatpush2.msra.mxu0 0.0
    %554 = vmatprep.subr.mxu0 0.0
    %555 = vmatpush2.msra.mxu0 0.0
    %556 = vmatprep.subr.mxu0 0.0
    %557 = vmatpush2.msra.mxu0 0.0
    %558 = vmatprep.subr.mxu0 0.0
    %559 = vmatpush2.msra.mxu0 0.0
    %560 = vmatprep.subr.mxu0 0.0
    %561 = vmatpush2.msra.mxu0 0.0
    %562 = vmatprep.subr.mxu0 0.0
    %563 = vmatpush2.msra.mxu0 0.0
    %564 = vmatprep.subr.mxu0 0.0
    %565 = vmatpush2.msra.mxu0 0.0
    %566 = vmatprep.subr.mxu0 0.0
    %567 = vmatpush2.msra.mxu0 0.0
    %568 = vmatprep.subr.mxu0 0.0
    %569 = vmatpush2.msra.mxu0 0.0
    %570 = vmatprep.subr.mxu0 0.0
    %571 = vmatpush2.msra.mxu0 0.0
    %572 = vmatprep.subr.mxu0 0.0
    %573 = vmatpush2.msra.mxu0 0.0
    %574 = vmatprep.subr.mxu0 0.0
    %575 = vmatpush2.msra.mxu0 0.0
    %576 = vmatprep.subr.mxu0 0.0
    %577 = vmatpush2.msra.mxu0 0.0
    %578 = vmatprep.subr.mxu0 0.0
    %579 = vmatpush2.msra.mxu0 0.0
    %580 = vmatprep.subr.mxu0 0.0
    %581 = vmatpush2.msra.mxu0 0.0
    %582 = vmatprep.subr.mxu0 0.0
    %583 = vmatpush2.msra.mxu0 0.0
    %584 = vmatprep.mubr.f32.mxu0 0.0
    %585 = vmatmul.mubr.f32.gmra.mxu0 %v514
    %v586 = vpop.f32.mrf.mxu0
    %v587 = vadd.f32 0.0, %v586
    %v588 = vpop.f32.mrf.mxu0
    %v589 = vadd.f32 0.0, %v588
    %590 = vdwg.mxu0
    %591 = vmatprep.subr.mxu0 0.0
    %592 = vmatpush1.msra.mxu0 %v346
    %593 = vmatprep.subr.mxu0 0.0
    %594 = vmatpush1.msra.mxu0 %v343
    %595 = vmatprep.subr.mxu0 0.0
    %596 = vmatpush1.msra.mxu0 %v340
    %597 = vmatprep.subr.mxu0 0.0
    %598 = vmatpush1.msra.mxu0 %v337
    %599 = vmatprep.subr.mxu0 0.0
    %600 = vmatpush1.msra.mxu0 %v334
    %601 = vmatprep.subr.mxu0 0.0
    %602 = vmatpush1.msra.mxu0 %v331
    %603 = vmatprep.subr.mxu0 0.0
    %604 = vmatpush1.msra.mxu0 %v328
    %605 = vmatprep.subr.mxu0 0.0
    %606 = vmatpush1.msra.mxu0 %v325
    %607 = vmatprep.subr.mxu0 0.0
    %608 = vmatpush1.msra.mxu0 %v322
    %609 = vmatprep.subr.mxu0 0.0
    %610 = vmatpush1.msra.mxu0 %v319
    %611 = vmatprep.subr.mxu0 0.0
    %612 = vmatpush1.msra.mxu0 %v316
    %613 = vmatprep.subr.mxu0 0.0
    %614 = vmatpush1.msra.mxu0 %v313
    %615 = vmatprep.subr.mxu0 0.0
    %616 = vmatpush1.msra.mxu0 %v310
    %617 = vmatprep.subr.mxu0 0.0
    %618 = vmatpush1.msra.mxu0 %v307
    %619 = vmatprep.subr.mxu0 0.0
    %620 = vmatpush1.msra.mxu0 %v304
    %621 = vmatprep.subr.mxu0 0.0
    %622 = vmatpush1.msra.mxu0 %v301
    %623 = vmatprep.subr.mxu0 0.0
    %624 = vmatpush2.msra.mxu0 0.0
    %625 = vmatprep.subr.mxu0 0.0
    %626 = vmatpush2.msra.mxu0 0.0
    %627 = vmatprep.subr.mxu0 0.0
    %628 = vmatpush2.msra.mxu0 0.0
    %629 = vmatprep.subr.mxu0 0.0
    %630 = vmatpush2.msra.mxu0 0.0
    %631 = vmatprep.subr.mxu0 0.0
    %632 = vmatpush2.msra.mxu0 0.0
    %633 = vmatprep.subr.mxu0 0.0
    %634 = vmatpush2.msra.mxu0 0.0
    %635 = vmatprep.subr.mxu0 0.0
    %636 = vmatpush2.msra.mxu0 0.0
    %637 = vmatprep.subr.mxu0 0.0
    %638 = vmatpush2.msra.mxu0 0.0
    %639 = vmatprep.subr.mxu0 0.0
    %640 = vmatpush2.msra.mxu0 0.0
    %641 = vmatprep.subr.mxu0 0.0
    %642 = vmatpush2.msra.mxu0 0.0
    %643 = vmatprep.subr.mxu0 0.0
    %644 = vmatpush2.msra.mxu0 0.0
    %645 = vmatprep.subr.mxu0 0.0
    %646 = vmatpush2.msra.mxu0 0.0
    %647 = vmatprep.subr.mxu0 0.0
    %648 = vmatpush2.msra.mxu0 0.0
    %649 = vmatprep.subr.mxu0 0.0
    %650 = vmatpush2.msra.mxu0 0.0
    %651 = vmatprep.subr.mxu0 0.0
    %652 = vmatpush2.msra.mxu0 0.0
    %653 = vmatprep.subr.mxu0 0.0
    %654 = vmatpush2.msra.mxu0 0.0
    %655 = vmatprep.mubr.f32.mxu0 0.0
    %656 = vmatmul.mubr.f32.gmra.mxu0 %v514
    %v657 = vpop.f32.mrf.mxu0
    %v658 = vadd.f32 0.0, %v657
    %v659 = vpop.f32.mrf.mxu0
    %660 = vdwg.mxu0
    %v661 = vadd.f32 %v517, %v587
    %v662 = vxor.u32 %v661, 2147483648
    %v663 = vmul.f32 %v662, 1.442695
    %v664 = vpow.pop %v663
    %v665 = vadd.f32 %v664, 1.0
    %v666 = vrcp.pop %v665
    %v667 = vmul.f32 1.0, %v666
    %v668 = vadd.f32 %v518, %v589
    %v669 = vxor.u32 %v668, 2147483648
    %v670 = vmul.f32 %v669, 1.442695
    %v671 = vpow.pop %v670
    %v672 = vadd.f32 %v671, 1.0
    %v673 = vrcp.pop %v672
    %v674 = vmul.f32 1.0, %v673
    %v675 = vadd.f32 %v658, %v506
    %v676 = vmul.f32 %v667, %v675
    %v677 = vadd.f32 %v519, %v676
    %v678 = vtanh.pop %v677
    %v679 = vsub.f32 %v514, %v678
    %v680 = vmul.f32 %v674, %v679
    %v681 = vadd.f32 %v678, %v680
    %vm682 = vcmp.eq.s32.totalorder %v295, 1
    %v683 = vsel %vm682, %v681, %v516
    %v684 = vld [vmem:[#allocation2 + $0x30] sm:$0xff]
    %v685 = vld [vmem:[#allocation2 + $0x38] sm:$0xff]
    %v686 = vld [vmem:[#allocation2 + $0x40] sm:$0xff]
    %687 = vmatprep.subr.mxu0 %v345
    %688 = vmatpush1.msra.mxu0 %v344
    %689 = vmatprep.subr.mxu0 %v342
    %690 = vmatpush1.msra.mxu0 %v341
    %691 = vmatprep.subr.mxu0 %v339
    %692 = vmatpush1.msra.mxu0 %v338
    %693 = vmatprep.subr.mxu0 %v336
    %694 = vmatpush1.msra.mxu0 %v335
    %695 = vmatprep.subr.mxu0 %v333
    %696 = vmatpush1.msra.mxu0 %v332
    %697 = vmatprep.subr.mxu0 %v330
    %698 = vmatpush1.msra.mxu0 %v329
    %699 = vmatprep.subr.mxu0 %v327
    %700 = vmatpush1.msra.mxu0 %v326
    %701 = vmatprep.subr.mxu0 %v324
    %702 = vmatpush1.msra.mxu0 %v323
    %703 = vmatprep.subr.mxu0 %v321
    %704 = vmatpush1.msra.mxu0 %v320
    %705 = vmatprep.subr.mxu0 %v318
    %706 = vmatpush1.msra.mxu0 %v317
    %707 = vmatprep.subr.mxu0 %v315
    %708 = vmatpush1.msra.mxu0 %v314
    %709 = vmatprep.subr.mxu0 %v312
    %710 = vmatpush1.msra.mxu0 %v311
    %711 = vmatprep.subr.mxu0 %v309
    %712 = vmatpush1.msra.mxu0 %v308
    %713 = vmatprep.subr.mxu0 %v306
    %714 = vmatpush1.msra.mxu0 %v305
    %715 = vmatprep.subr.mxu0 %v303
    %716 = vmatpush1.msra.mxu0 %v302
    %717 = vmatprep.subr.mxu0 %v300
    %718 = vmatpush1.msra.mxu0 %v299
    %719 = vmatprep.subr.mxu0 0.0
    %720 = vmatpush2.msra.mxu0 0.0
    %721 = vmatprep.subr.mxu0 0.0
    %722 = vmatpush2.msra.mxu0 0.0
    %723 = vmatprep.subr.mxu0 0.0
    %724 = vmatpush2.msra.mxu0 0.0
    %725 = vmatprep.subr.mxu0 0.0
    %726 = vmatpush2.msra.mxu0 0.0
    %727 = vmatprep.subr.mxu0 0.0
    %728 = vmatpush2.msra.mxu0 0.0
    %729 = vmatprep.subr.mxu0 0.0
    %730 = vmatpush2.msra.mxu0 0.0
    %731 = vmatprep.subr.mxu0 0.0
    %732 = vmatpush2.msra.mxu0 0.0
    %733 = vmatprep.subr.mxu0 0.0
    %734 = vmatpush2.msra.mxu0 0.0
    %735 = vmatprep.subr.mxu0 0.0
    %736 = vmatpush2.msra.mxu0 0.0
    %737 = vmatprep.subr.mxu0 0.0
    %738 = vmatpush2.msra.mxu0 0.0
    %739 = vmatprep.subr.mxu0 0.0
    %740 = vmatpush2.msra.mxu0 0.0
    %741 = vmatprep.subr.mxu0 0.0
    %742 = vmatpush2.msra.mxu0 0.0
    %743 = vmatprep.subr.mxu0 0.0
    %744 = vmatpush2.msra.mxu0 0.0
    %745 = vmatprep.subr.mxu0 0.0
    %746 = vmatpush2.msra.mxu0 0.0
    %747 = vmatprep.subr.mxu0 0.0
    %748 = vmatpush2.msra.mxu0 0.0
    %749 = vmatprep.subr.mxu0 0.0
    %750 = vmatpush2.msra.mxu0 0.0
    %751 = vmatprep.mubr.f32.mxu0 0.0
    %752 = vmatmul.mubr.f32.gmra.mxu0 %v681
    %v753 = vpop.f32.mrf.mxu0
    %v754 = vadd.f32 0.0, %v753
    %v755 = vpop.f32.mrf.mxu0
    %v756 = vadd.f32 0.0, %v755
    %757 = vdwg.mxu0
    %758 = vmatprep.subr.mxu0 0.0
    %759 = vmatpush1.msra.mxu0 %v346
    %760 = vmatprep.subr.mxu0 0.0
    %761 = vmatpush1.msra.mxu0 %v343
    %762 = vmatprep.subr.mxu0 0.0
    %763 = vmatpush1.msra.mxu0 %v340
    %764 = vmatprep.subr.mxu0 0.0
    %765 = vmatpush1.msra.mxu0 %v337
    %766 = vmatprep.subr.mxu0 0.0
    %767 = vmatpush1.msra.mxu0 %v334
    %768 = vmatprep.subr.mxu0 0.0
    %769 = vmatpush1.msra.mxu0 %v331
    %770 = vmatprep.subr.mxu0 0.0
    %771 = vmatpush1.msra.mxu0 %v328
    %772 = vmatprep.subr.mxu0 0.0
    %773 = vmatpush1.msra.mxu0 %v325
    %774 = vmatprep.subr.mxu0 0.0
    %775 = vmatpush1.msra.mxu0 %v322
    %776 = vmatprep.subr.mxu0 0.0
    %777 = vmatpush1.msra.mxu0 %v319
    %778 = vmatprep.subr.mxu0 0.0
    %779 = vmatpush1.msra.mxu0 %v316
    %780 = vmatprep.subr.mxu0 0.0
    %781 = vmatpush1.msra.mxu0 %v313
    %782 = vmatprep.subr.mxu0 0.0
    %783 = vmatpush1.msra.mxu0 %v310
    %784 = vmatprep.subr.mxu0 0.0
    %785 = vmatpush1.msra.mxu0 %v307
    %786 = vmatprep.subr.mxu0 0.0
    %787 = vmatpush1.msra.mxu0 %v304
    %788 = vmatprep.subr.mxu0 0.0
    %789 = vmatpush1.msra.mxu0 %v301
    %790 = vmatprep.subr.mxu0 0.0
    %791 = vmatpush2.msra.mxu0 0.0
    %792 = vmatprep.subr.mxu0 0.0
    %793 = vmatpush2.msra.mxu0 0.0
    %794 = vmatprep.subr.mxu0 0.0
    %795 = vmatpush2.msra.mxu0 0.0
    %796 = vmatprep.subr.mxu0 0.0
    %797 = vmatpush2.msra.mxu0 0.0
    %798 = vmatprep.subr.mxu0 0.0
    %799 = vmatpush2.msra.mxu0 0.0
    %800 = vmatprep.subr.mxu0 0.0
    %801 = vmatpush2.msra.mxu0 0.0
    %802 = vmatprep.subr.mxu0 0.0
    %803 = vmatpush2.msra.mxu0 0.0
    %804 = vmatprep.subr.mxu0 0.0
    %805 = vmatpush2.msra.mxu0 0.0
    %806 = vmatprep.subr.mxu0 0.0
    %807 = vmatpush2.msra.mxu0 0.0
    %808 = vmatprep.subr.mxu0 0.0
    %809 = vmatpush2.msra.mxu0 0.0
    %810 = vmatprep.subr.mxu0 0.0
    %811 = vmatpush2.msra.mxu0 0.0
    %812 = vmatprep.subr.mxu0 0.0
    %813 = vmatpush2.msra.mxu0 0.0
    %814 = vmatprep.subr.mxu0 0.0
    %815 = vmatpush2.msra.mxu0 0.0
    %816 = vmatprep.subr.mxu0 0.0
    %817 = vmatpush2.msra.mxu0 0.0
    %818 = vmatprep.subr.mxu0 0.0
    %819 = vmatpush2.msra.mxu0 0.0
    %820 = vmatprep.subr.mxu0 0.0
    %821 = vmatpush2.msra.mxu0 0.0
    %822 = vmatprep.mubr.f32.mxu0 0.0
    %823 = vmatmul.mubr.f32.gmra.mxu0 %v681
    %v824 = vpop.f32.mrf.mxu0
    %v825 = vadd.f32 0.0, %v824
    %v826 = vpop.f32.mrf.mxu0
    %827 = vdwg.mxu0
    %v828 = vadd.f32 %v684, %v754
    %v829 = vxor.u32 %v828, 2147483648
    %v830 = vmul.f32 %v829, 1.442695
    %v831 = vpow.pop %v830
    %v832 = vadd.f32 %v831, 1.0
    %v833 = vrcp.pop %v832
    %v834 = vmul.f32 1.0, %v833
    %v835 = vadd.f32 %v685, %v756
    %v836 = vxor.u32 %v835, 2147483648
    %v837 = vmul.f32 %v836, 1.442695
    %v838 = vpow.pop %v837
    %v839 = vadd.f32 %v838, 1.0
    %v840 = vrcp.pop %v839
    %v841 = vmul.f32 1.0, %v840
    %v842 = vadd.f32 %v825, %v506
    %v843 = vmul.f32 %v834, %v842
    %v844 = vadd.f32 %v686, %v843
    %v845 = vtanh.pop %v844
    %v846 = vsub.f32 %v681, %v845
    %v847 = vmul.f32 %v841, %v846
    %v848 = vadd.f32 %v845, %v847
    %vm849 = vcmp.eq.s32.totalorder %v295, 2
    %v850 = vsel %vm849, %v848, %v683
    %v851 = vld [vmem:[#allocation2 + $0x48] sm:$0xff]
    %v852 = vld [vmem:[#allocation2 + $0x50] sm:$0xff]
    %v853 = vld [vmem:[#allocation2 + $0x58] sm:$0xff]
    %854 = vmatprep.subr.mxu0 %v345
    %855 = vmatpush1.msra.mxu0 %v344
    %856 = vmatprep.subr.mxu0 %v342
    %857 = vmatpush1.msra.mxu0 %v341
    %858 = vmatprep.subr.mxu0 %v339
    %859 = vmatpush1.msra.mxu0 %v338
    %860 = vmatprep.subr.mxu0 %v336
    %861 = vmatpush1.msra.mxu0 %v335
    %862 = vmatprep.subr.mxu0 %v333
    %863 = vmatpush1.msra.mxu0 %v332
    %864 = vmatprep.subr.mxu0 %v330
    %865 = vmatpush1.msra.mxu0 %v329
    %866 = vmatprep.subr.mxu0 %v327
    %867 = vmatpush1.msra.mxu0 %v326
    %868 = vmatprep.subr.mxu0 %v324
    %869 = vmatpush1.msra.mxu0 %v323
    %870 = vmatprep.subr.mxu0 %v321
    %871 = vmatpush1.msra.mxu0 %v320
    %872 = vmatprep.subr.mxu0 %v318
    %873 = vmatpush1.msra.mxu0 %v317
    %874 = vmatprep.subr.mxu0 %v315
    %875 = vmatpush1.msra.mxu0 %v314
    %876 = vmatprep.subr.mxu0 %v312
    %877 = vmatpush1.msra.mxu0 %v311
    %878 = vmatprep.subr.mxu0 %v309
    %879 = vmatpush1.msra.mxu0 %v308
    %880 = vmatprep.subr.mxu0 %v306
    %881 = vmatpush1.msra.mxu0 %v305
    %882 = vmatprep.subr.mxu0 %v303
    %883 = vmatpush1.msra.mxu0 %v302
    %884 = vmatprep.subr.mxu0 %v300
    %885 = vmatpush1.msra.mxu0 %v299
    %886 = vmatprep.subr.mxu0 0.0
    %887 = vmatpush2.msra.mxu0 0.0
    %888 = vmatprep.subr.mxu0 0.0
    %889 = vmatpush2.msra.mxu0 0.0
    %890 = vmatprep.subr.mxu0 0.0
    %891 = vmatpush2.msra.mxu0 0.0
    %892 = vmatprep.subr.mxu0 0.0
    %893 = vmatpush2.msra.mxu0 0.0
    %894 = vmatprep.subr.mxu0 0.0
    %895 = vmatpush2.msra.mxu0 0.0
    %896 = vmatprep.subr.mxu0 0.0
    %897 = vmatpush2.msra.mxu0 0.0
    %898 = vmatprep.subr.mxu0 0.0
    %899 = vmatpush2.msra.mxu0 0.0
    %900 = vmatprep.subr.mxu0 0.0
    %901 = vmatpush2.msra.mxu0 0.0
    %902 = vmatprep.subr.mxu0 0.0
    %903 = vmatpush2.msra.mxu0 0.0
    %904 = vmatprep.subr.mxu0 0.0
    %905 = vmatpush2.msra.mxu0 0.0
    %906 = vmatprep.subr.mxu0 0.0
    %907 = vmatpush2.msra.mxu0 0.0
    %908 = vmatprep.subr.mxu0 0.0
    %909 = vmatpush2.msra.mxu0 0.0
    %910 = vmatprep.subr.mxu0 0.0
    %911 = vmatpush2.msra.mxu0 0.0
    %912 = vmatprep.subr.mxu0 0.0
    %913 = vmatpush2.msra.mxu0 0.0
    %914 = vmatprep.subr.mxu0 0.0
    %915 = vmatpush2.msra.mxu0 0.0
    %916 = vmatprep.subr.mxu0 0.0
    %917 = vmatpush2.msra.mxu0 0.0
    %918 = vmatprep.mubr.f32.mxu0 0.0
    %919 = vmatmul.mubr.f32.gmra.mxu0 %v848
    %v920 = vpop.f32.mrf.mxu0
    %v921 = vadd.f32 0.0, %v920
    %v922 = vpop.f32.mrf.mxu0
    %v923 = vadd.f32 0.0, %v922
    %924 = vdwg.mxu0
    %925 = vmatprep.subr.mxu0 0.0
    %926 = vmatpush1.msra.mxu0 %v346
    %927 = vmatprep.subr.mxu0 0.0
    %928 = vmatpush1.msra.mxu0 %v343
    %929 = vmatprep.subr.mxu0 0.0
    %930 = vmatpush1.msra.mxu0 %v340
    %931 = vmatprep.subr.mxu0 0.0
    %932 = vmatpush1.msra.mxu0 %v337
    %933 = vmatprep.subr.mxu0 0.0
    %934 = vmatpush1.msra.mxu0 %v334
    %935 = vmatprep.subr.mxu0 0.0
    %936 = vmatpush1.msra.mxu0 %v331
    %937 = vmatprep.subr.mxu0 0.0
    %938 = vmatpush1.msra.mxu0 %v328
    %939 = vmatprep.subr.mxu0 0.0
    %940 = vmatpush1.msra.mxu0 %v325
    %941 = vmatprep.subr.mxu0 0.0
    %942 = vmatpush1.msra.mxu0 %v322
    %943 = vmatprep.subr.mxu0 0.0
    %944 = vmatpush1.msra.mxu0 %v319
    %945 = vmatprep.subr.mxu0 0.0
    %946 = vmatpush1.msra.mxu0 %v316
    %947 = vmatprep.subr.mxu0 0.0
    %948 = vmatpush1.msra.mxu0 %v313
    %949 = vmatprep.subr.mxu0 0.0
    %950 = vmatpush1.msra.mxu0 %v310
    %951 = vmatprep.subr.mxu0 0.0
    %952 = vmatpush1.msra.mxu0 %v307
    %953 = vmatprep.subr.mxu0 0.0
    %954 = vmatpush1.msra.mxu0 %v304
    %955 = vmatprep.subr.mxu0 0.0
    %956 = vmatpush1.msra.mxu0 %v301
    %957 = vmatprep.subr.mxu0 0.0
    %958 = vmatpush2.msra.mxu0 0.0
    %959 = vmatprep.subr.mxu0 0.0
    %960 = vmatpush2.msra.mxu0 0.0
    %961 = vmatprep.subr.mxu0 0.0
    %962 = vmatpush2.msra.mxu0 0.0
    %963 = vmatprep.subr.mxu0 0.0
    %964 = vmatpush2.msra.mxu0 0.0
    %965 = vmatprep.subr.mxu0 0.0
    %966 = vmatpush2.msra.mxu0 0.0
    %967 = vmatprep.subr.mxu0 0.0
    %968 = vmatpush2.msra.mxu0 0.0
    %969 = vmatprep.subr.mxu0 0.0
    %970 = vmatpush2.msra.mxu0 0.0
    %971 = vmatprep.subr.mxu0 0.0
    %972 = vmatpush2.msra.mxu0 0.0
    %973 = vmatprep.subr.mxu0 0.0
    %974 = vmatpush2.msra.mxu0 0.0
    %975 = vmatprep.subr.mxu0 0.0
    %976 = vmatpush2.msra.mxu0 0.0
    %977 = vmatprep.subr.mxu0 0.0
    %978 = vmatpush2.msra.mxu0 0.0
    %979 = vmatprep.subr.mxu0 0.0
    %980 = vmatpush2.msra.mxu0 0.0
    %981 = vmatprep.subr.mxu0 0.0
    %982 = vmatpush2.msra.mxu0 0.0
    %983 = vmatprep.subr.mxu0 0.0
    %984 = vmatpush2.msra.mxu0 0.0
    %985 = vmatprep.subr.mxu0 0.0
    %986 = vmatpush2.msra.mxu0 0.0
    %987 = vmatprep.subr.mxu0 0.0
    %988 = vmatpush2.msra.mxu0 0.0
    %989 = vmatprep.mubr.f32.mxu0 0.0
    %990 = vmatmul.mubr.f32.gmra.mxu0 %v848
    %v991 = vpop.f32.mrf.mxu0
    %v992 = vadd.f32 0.0, %v991
    %v993 = vpop.f32.mrf.mxu0
    %994 = vdwg.mxu0
    %v995 = vadd.f32 %v851, %v921
    %v996 = vxor.u32 %v995, 2147483648
    %v997 = vmul.f32 %v996, 1.442695
    %v998 = vpow.pop %v997
    %v999 = vadd.f32 %v998, 1.0
    %v1000 = vrcp.pop %v999
    %v1001 = vmul.f32 1.0, %v1000
    %v1002 = vadd.f32 %v852, %v923
    %v1003 = vxor.u32 %v1002, 2147483648
    %v1004 = vmul.f32 %v1003, 1.442695
    %v1005 = vpow.pop %v1004
    %v1006 = vadd.f32 %v1005, 1.0
    %v1007 = vrcp.pop %v1006
    %v1008 = vmul.f32 1.0, %v1007
    %v1009 = vadd.f32 %v992, %v506
    %v1010 = vmul.f32 %v1001, %v1009
    %v1011 = vadd.f32 %v853, %v1010
    %v1012 = vtanh.pop %v1011
    %v1013 = vsub.f32 %v848, %v1012
    %v1014 = vmul.f32 %v1008, %v1013
    %v1015 = vadd.f32 %v1012, %v1014
    %vm1016 = vcmp.eq.s32.totalorder %v295, 3
    %v1017 = vsel %vm1016, %v1015, %v850
    %v1018 = vld [vmem:[#allocation2 + $0x60] sm:$0xff]
    %v1019 = vld [vmem:[#allocation2 + $0x68] sm:$0xff]
    %v1020 = vld [vmem:[#allocation2 + $0x70] sm:$0xff]
    %1021 = vmatprep.subr.mxu0 %v345
    %1022 = vmatpush1.msra.mxu0 %v344
    %1023 = vmatprep.subr.mxu0 %v342
    %1024 = vmatpush1.msra.mxu0 %v341
    %1025 = vmatprep.subr.mxu0 %v339
    %1026 = vmatpush1.msra.mxu0 %v338
    %1027 = vmatprep.subr.mxu0 %v336
    %1028 = vmatpush1.msra.mxu0 %v335
    %1029 = vmatprep.subr.mxu0 %v333
    %1030 = vmatpush1.msra.mxu0 %v332
    %1031 = vmatprep.subr.mxu0 %v330
    %1032 = vmatpush1.msra.mxu0 %v329
    %1033 = vmatprep.subr.mxu0 %v327
    %1034 = vmatpush1.msra.mxu0 %v326
    %1035 = vmatprep.subr.mxu0 %v324
    %1036 = vmatpush1.msra.mxu0 %v323
    %1037 = vmatprep.subr.mxu0 %v321
    %1038 = vmatpush1.msra.mxu0 %v320
    %1039 = vmatprep.subr.mxu0 %v318
    %1040 = vmatpush1.msra.mxu0 %v317
    %1041 = vmatprep.subr.mxu0 %v315
    %1042 = vmatpush1.msra.mxu0 %v314
    %1043 = vmatprep.subr.mxu0 %v312
    %1044 = vmatpush1.msra.mxu0 %v311
    %1045 = vmatprep.subr.mxu0 %v309
    %1046 = vmatpush1.msra.mxu0 %v308
    %1047 = vmatprep.subr.mxu0 %v306
    %1048 = vmatpush1.msra.mxu0 %v305
    %1049 = vmatprep.subr.mxu0 %v303
    %1050 = vmatpush1.msra.mxu0 %v302
    %1051 = vmatprep.subr.mxu0 %v300
    %1052 = vmatpush1.msra.mxu0 %v299
    %1053 = vmatprep.subr.mxu0 0.0
    %1054 = vmatpush2.msra.mxu0 0.0
    %1055 = vmatprep.subr.mxu0 0.0
    %1056 = vmatpush2.msra.mxu0 0.0
    %1057 = vmatprep.subr.mxu0 0.0
    %1058 = vmatpush2.msra.mxu0 0.0
    %1059 = vmatprep.subr.mxu0 0.0
    %1060 = vmatpush2.msra.mxu0 0.0
    %1061 = vmatprep.subr.mxu0 0.0
    %1062 = vmatpush2.msra.mxu0 0.0
    %1063 = vmatprep.subr.mxu0 0.0
    %1064 = vmatpush2.msra.mxu0 0.0
    %1065 = vmatprep.subr.mxu0 0.0
    %1066 = vmatpush2.msra.mxu0 0.0
    %1067 = vmatprep.subr.mxu0 0.0
    %1068 = vmatpush2.msra.mxu0 0.0
    %1069 = vmatprep.subr.mxu0 0.0
    %1070 = vmatpush2.msra.mxu0 0.0
    %1071 = vmatprep.subr.mxu0 0.0
    %1072 = vmatpush2.msra.mxu0 0.0
    %1073 = vmatprep.subr.mxu0 0.0
    %1074 = vmatpush2.msra.mxu0 0.0
    %1075 = vmatprep.subr.mxu0 0.0
    %1076 = vmatpush2.msra.mxu0 0.0
    %1077 = vmatprep.subr.mxu0 0.0
    %1078 = vmatpush2.msra.mxu0 0.0
    %1079 = vmatprep.subr.mxu0 0.0
    %1080 = vmatpush2.msra.mxu0 0.0
    %1081 = vmatprep.subr.mxu0 0.0
    %1082 = vmatpush2.msra.mxu0 0.0
    %1083 = vmatprep.subr.mxu0 0.0
    %1084 = vmatpush2.msra.mxu0 0.0
    %1085 = vmatprep.mubr.f32.mxu0 0.0
    %1086 = vmatmul.mubr.f32.gmra.mxu0 %v1015
    %v1087 = vpop.f32.mrf.mxu0
    %v1088 = vadd.f32 0.0, %v1087
    %v1089 = vpop.f32.mrf.mxu0
    %v1090 = vadd.f32 0.0, %v1089
    %1091 = vdwg.mxu0
    %1092 = vmatprep.subr.mxu0 0.0
    %1093 = vmatpush1.msra.mxu0 %v346
    %1094 = vmatprep.subr.mxu0 0.0
    %1095 = vmatpush1.msra.mxu0 %v343
    %1096 = vmatprep.subr.mxu0 0.0
    %1097 = vmatpush1.msra.mxu0 %v340
    %1098 = vmatprep.subr.mxu0 0.0
    %1099 = vmatpush1.msra.mxu0 %v337
    %1100 = vmatprep.subr.mxu0 0.0
    %1101 = vmatpush1.msra.mxu0 %v334
    %1102 = vmatprep.subr.mxu0 0.0
    %1103 = vmatpush1.msra.mxu0 %v331
    %1104 = vmatprep.subr.mxu0 0.0
    %1105 = vmatpush1.msra.mxu0 %v328
    %1106 = vmatprep.subr.mxu0 0.0
    %1107 = vmatpush1.msra.mxu0 %v325
    %1108 = vmatprep.subr.mxu0 0.0
    %1109 = vmatpush1.msra.mxu0 %v322
    %1110 = vmatprep.subr.mxu0 0.0
    %1111 = vmatpush1.msra.mxu0 %v319
    %1112 = vmatprep.subr.mxu0 0.0
    %1113 = vmatpush1.msra.mxu0 %v316
    %1114 = vmatprep.subr.mxu0 0.0
    %1115 = vmatpush1.msra.mxu0 %v313
    %1116 = vmatprep.subr.mxu0 0.0
    %1117 = vmatpush1.msra.mxu0 %v310
    %1118 = vmatprep.subr.mxu0 0.0
    %1119 = vmatpush1.msra.mxu0 %v307
    %1120 = vmatprep.subr.mxu0 0.0
    %1121 = vmatpush1.msra.mxu0 %v304
    %1122 = vmatprep.subr.mxu0 0.0
    %1123 = vmatpush1.msra.mxu0 %v301
    %1124 = vmatprep.subr.mxu0 0.0
    %1125 = vmatpush2.msra.mxu0 0.0
    %1126 = vmatprep.subr.mxu0 0.0
    %1127 = vmatpush2.msra.mxu0 0.0
    %1128 = vmatprep.subr.mxu0 0.0
    %1129 = vmatpush2.msra.mxu0 0.0
    %1130 = vmatprep.subr.mxu0 0.0
    %1131 = vmatpush2.msra.mxu0 0.0
    %1132 = vmatprep.subr.mxu0 0.0
    %1133 = vmatpush2.msra.mxu0 0.0
    %1134 = vmatprep.subr.mxu0 0.0
    %1135 = vmatpush2.msra.mxu0 0.0
    %1136 = vmatprep.subr.mxu0 0.0
    %1137 = vmatpush2.msra.mxu0 0.0
    %1138 = vmatprep.subr.mxu0 0.0
    %1139 = vmatpush2.msra.mxu0 0.0
    %1140 = vmatprep.subr.mxu0 0.0
    %1141 = vmatpush2.msra.mxu0 0.0
    %1142 = vmatprep.subr.mxu0 0.0
    %1143 = vmatpush2.msra.mxu0 0.0
    %1144 = vmatprep.subr.mxu0 0.0
    %1145 = vmatpush2.msra.mxu0 0.0
    %1146 = vmatprep.subr.mxu0 0.0
    %1147 = vmatpush2.msra.mxu0 0.0
    %1148 = vmatprep.subr.mxu0 0.0
    %1149 = vmatpush2.msra.mxu0 0.0
    %1150 = vmatprep.subr.mxu0 0.0
    %1151 = vmatpush2.msra.mxu0 0.0
    %1152 = vmatprep.subr.mxu0 0.0
    %1153 = vmatpush2.msra.mxu0 0.0
    %1154 = vmatprep.subr.mxu0 0.0
    %1155 = vmatpush2.msra.mxu0 0.0
    %1156 = vmatprep.mubr.f32.mxu0 0.0
    %1157 = vmatmul.mubr.f32.gmra.mxu0 %v1015
    %v1158 = vpop.f32.mrf.mxu0
    %v1159 = vadd.f32 0.0, %v1158
    %v1160 = vpop.f32.mrf.mxu0
    %1161 = vdwg.mxu0
    %v1162 = vadd.f32 %v1018, %v1088
    %v1163 = vxor.u32 %v1162, 2147483648
    %v1164 = vmul.f32 %v1163, 1.442695
    %v1165 = vpow.pop %v1164
    %v1166 = vadd.f32 %v1165, 1.0
    %v1167 = vrcp.pop %v1166
    %v1168 = vmul.f32 1.0, %v1167
    %v1169 = vadd.f32 %v1019, %v1090
    %v1170 = vxor.u32 %v1169, 2147483648
    %v1171 = vmul.f32 %v1170, 1.442695
    %v1172 = vpow.pop %v1171
    %v1173 = vadd.f32 %v1172, 1.0
    %v1174 = vrcp.pop %v1173
    %v1175 = vmul.f32 1.0, %v1174
    %v1176 = vadd.f32 %v1159, %v506
    %v1177 = vmul.f32 %v1168, %v1176
    %v1178 = vadd.f32 %v1020, %v1177
    %v1179 = vtanh.pop %v1178
    %v1180 = vsub.f32 %v1015, %v1179
    %v1181 = vmul.f32 %v1175, %v1180
    %v1182 = vadd.f32 %v1179, %v1181
    %vm1183 = vcmp.eq.s32.totalorder %v295, 4
    %v1184 = vsel %vm1183, %v1182, %v1017
    %v1185 = vld [vmem:[#allocation2 + $0x78] sm:$0xff]
    %v1186 = vld [vmem:[#allocation2 + $0x80] sm:$0xff]
    %v1187 = vld [vmem:[#allocation2 + $0x88] sm:$0xff]
    %1188 = vmatprep.subr.mxu0 %v345
    %1189 = vmatpush1.msra.mxu0 %v344
    %1190 = vmatprep.subr.mxu0 %v342
    %1191 = vmatpush1.msra.mxu0 %v341
    %1192 = vmatprep.subr.mxu0 %v339
    %1193 = vmatpush1.msra.mxu0 %v338
    %1194 = vmatprep.subr.mxu0 %v336
    %1195 = vmatpush1.msra.mxu0 %v335
    %1196 = vmatprep.subr.mxu0 %v333
    %1197 = vmatpush1.msra.mxu0 %v332
    %1198 = vmatprep.subr.mxu0 %v330
    %1199 = vmatpush1.msra.mxu0 %v329
    %1200 = vmatprep.subr.mxu0 %v327
    %1201 = vmatpush1.msra.mxu0 %v326
    %1202 = vmatprep.subr.mxu0 %v324
    %1203 = vmatpush1.msra.mxu0 %v323
    %1204 = vmatprep.subr.mxu0 %v321
    %1205 = vmatpush1.msra.mxu0 %v320
    %1206 = vmatprep.subr.mxu0 %v318
    %1207 = vmatpush1.msra.mxu0 %v317
    %1208 = vmatprep.subr.mxu0 %v315
    %1209 = vmatpush1.msra.mxu0 %v314
    %1210 = vmatprep.subr.mxu0 %v312
    %1211 = vmatpush1.msra.mxu0 %v311
    %1212 = vmatprep.subr.mxu0 %v309
    %1213 = vmatpush1.msra.mxu0 %v308
    %1214 = vmatprep.subr.mxu0 %v306
    %1215 = vmatpush1.msra.mxu0 %v305
    %1216 = vmatprep.subr.mxu0 %v303
    %1217 = vmatpush1.msra.mxu0 %v302
    %1218 = vmatprep.subr.mxu0 %v300
    %1219 = vmatpush1.msra.mxu0 %v299
    %1220 = vmatprep.subr.mxu0 0.0
    %1221 = vmatpush2.msra.mxu0 0.0
    %1222 = vmatprep.subr.mxu0 0.0
    %1223 = vmatpush2.msra.mxu0 0.0
    %1224 = vmatprep.subr.mxu0 0.0
    %1225 = vmatpush2.msra.mxu0 0.0
    %1226 = vmatprep.subr.mxu0 0.0
    %1227 = vmatpush2.msra.mxu0 0.0
    %1228 = vmatprep.subr.mxu0 0.0
    %1229 = vmatpush2.msra.mxu0 0.0
    %1230 = vmatprep.subr.mxu0 0.0
    %1231 = vmatpush2.msra.mxu0 0.0
    %1232 = vmatprep.subr.mxu0 0.0
    %1233 = vmatpush2.msra.mxu0 0.0
    %1234 = vmatprep.subr.mxu0 0.0
    %1235 = vmatpush2.msra.mxu0 0.0
    %1236 = vmatprep.subr.mxu0 0.0
    %1237 = vmatpush2.msra.mxu0 0.0
    %1238 = vmatprep.subr.mxu0 0.0
    %1239 = vmatpush2.msra.mxu0 0.0
    %1240 = vmatprep.subr.mxu0 0.0
    %1241 = vmatpush2.msra.mxu0 0.0
    %1242 = vmatprep.subr.mxu0 0.0
    %1243 = vmatpush2.msra.mxu0 0.0
    %1244 = vmatprep.subr.mxu0 0.0
    %1245 = vmatpush2.msra.mxu0 0.0
    %1246 = vmatprep.subr.mxu0 0.0
    %1247 = vmatpush2.msra.mxu0 0.0
    %1248 = vmatprep.subr.mxu0 0.0
    %1249 = vmatpush2.msra.mxu0 0.0
    %1250 = vmatprep.subr.mxu0 0.0
    %1251 = vmatpush2.msra.mxu0 0.0
    %1252 = vmatprep.mubr.f32.mxu0 0.0
    %1253 = vmatmul.mubr.f32.gmra.mxu0 %v1182
    %v1254 = vpop.f32.mrf.mxu0
    %v1255 = vadd.f32 0.0, %v1254
    %v1256 = vpop.f32.mrf.mxu0
    %v1257 = vadd.f32 0.0, %v1256
    %1258 = vdwg.mxu0
    %1259 = vmatprep.subr.mxu0 0.0
    %1260 = vmatpush1.msra.mxu0 %v346
    %1261 = vmatprep.subr.mxu0 0.0
    %1262 = vmatpush1.msra.mxu0 %v343
    %1263 = vmatprep.subr.mxu0 0.0
    %1264 = vmatpush1.msra.mxu0 %v340
    %1265 = vmatprep.subr.mxu0 0.0
    %1266 = vmatpush1.msra.mxu0 %v337
    %1267 = vmatprep.subr.mxu0 0.0
    %1268 = vmatpush1.msra.mxu0 %v334
    %1269 = vmatprep.subr.mxu0 0.0
    %1270 = vmatpush1.msra.mxu0 %v331
    %1271 = vmatprep.subr.mxu0 0.0
    %1272 = vmatpush1.msra.mxu0 %v328
    %1273 = vmatprep.subr.mxu0 0.0
    %1274 = vmatpush1.msra.mxu0 %v325
    %1275 = vmatprep.subr.mxu0 0.0
    %1276 = vmatpush1.msra.mxu0 %v322
    %1277 = vmatprep.subr.mxu0 0.0
    %1278 = vmatpush1.msra.mxu0 %v319
    %1279 = vmatprep.subr.mxu0 0.0
    %1280 = vmatpush1.msra.mxu0 %v316
    %1281 = vmatprep.subr.mxu0 0.0
    %1282 = vmatpush1.msra.mxu0 %v313
    %1283 = vmatprep.subr.mxu0 0.0
    %1284 = vmatpush1.msra.mxu0 %v310
    %1285 = vmatprep.subr.mxu0 0.0
    %1286 = vmatpush1.msra.mxu0 %v307
    %1287 = vmatprep.subr.mxu0 0.0
    %1288 = vmatpush1.msra.mxu0 %v304
    %1289 = vmatprep.subr.mxu0 0.0
    %1290 = vmatpush1.msra.mxu0 %v301
    %1291 = vmatprep.subr.mxu0 0.0
    %1292 = vmatpush2.msra.mxu0 0.0
    %1293 = vmatprep.subr.mxu0 0.0
    %1294 = vmatpush2.msra.mxu0 0.0
    %1295 = vmatprep.subr.mxu0 0.0
    %1296 = vmatpush2.msra.mxu0 0.0
    %1297 = vmatprep.subr.mxu0 0.0
    %1298 = vmatpush2.msra.mxu0 0.0
    %1299 = vmatprep.subr.mxu0 0.0
    %1300 = vmatpush2.msra.mxu0 0.0
    %1301 = vmatprep.subr.mxu0 0.0
    %1302 = vmatpush2.msra.mxu0 0.0
    %1303 = vmatprep.subr.mxu0 0.0
    %1304 = vmatpush2.msra.mxu0 0.0
    %1305 = vmatprep.subr.mxu0 0.0
    %1306 = vmatpush2.msra.mxu0 0.0
    %1307 = vmatprep.subr.mxu0 0.0
    %1308 = vmatpush2.msra.mxu0 0.0
    %1309 = vmatprep.subr.mxu0 0.0
    %1310 = vmatpush2.msra.mxu0 0.0
    %1311 = vmatprep.subr.mxu0 0.0
    %1312 = vmatpush2.msra.mxu0 0.0
    %1313 = vmatprep.subr.mxu0 0.0
    %1314 = vmatpush2.msra.mxu0 0.0
    %1315 = vmatprep.subr.mxu0 0.0
    %1316 = vmatpush2.msra.mxu0 0.0
    %1317 = vmatprep.subr.mxu0 0.0
    %1318 = vmatpush2.msra.mxu0 0.0
    %1319 = vmatprep.subr.mxu0 0.0
    %1320 = vmatpush2.msra.mxu0 0.0
    %1321 = vmatprep.subr.mxu0 0.0
    %1322 = vmatpush2.msra.mxu0 0.0
    %1323 = vmatprep.mubr.f32.mxu0 0.0
    %1324 = vmatmul.mubr.f32.gmra.mxu0 %v1182
    %v1325 = vpop.f32.mrf.mxu0
    %v1326 = vadd.f32 0.0, %v1325
    %v1327 = vpop.f32.mrf.mxu0
    %1328 = vdwg.mxu0
    %v1329 = vadd.f32 %v1185, %v1255
    %v1330 = vxor.u32 %v1329, 2147483648
    %v1331 = vmul.f32 %v1330, 1.442695
    %v1332 = vpow.pop %v1331
    %v1333 = vadd.f32 %v1332, 1.0
    %v1334 = vrcp.pop %v1333
    %v1335 = vmul.f32 1.0, %v1334
    %v1336 = vadd.f32 %v1186, %v1257
    %v1337 = vxor.u32 %v1336, 2147483648
    %v1338 = vmul.f32 %v1337, 1.442695
    %v1339 = vpow.pop %v1338
    %v1340 = vadd.f32 %v1339, 1.0
    %v1341 = vrcp.pop %v1340
    %v1342 = vmul.f32 1.0, %v1341
    %v1343 = vadd.f32 %v1326, %v506
    %v1344 = vmul.f32 %v1335, %v1343
    %v1345 = vadd.f32 %v1187, %v1344
    %v1346 = vtanh.pop %v1345
    %v1347 = vsub.f32 %v1182, %v1346
    %v1348 = vmul.f32 %v1342, %v1347
    %v1349 = vadd.f32 %v1346, %v1348
    %vm1350 = vcmp.eq.s32.totalorder %v295, 5
    %v1351 = vsel %vm1350, %v1349, %v1184
    %v1352 = vld [vmem:[#allocation2 + $0x90] sm:$0xff]
    %v1353 = vld [vmem:[#allocation2 + $0x98] sm:$0xff]
    %v1354 = vld [vmem:[#allocation2 + $0xa0] sm:$0xff]
    %1355 = vmatprep.subr.mxu0 %v345
    %1356 = vmatpush1.msra.mxu0 %v344
    %1357 = vmatprep.subr.mxu0 %v342
    %1358 = vmatpush1.msra.mxu0 %v341
    %1359 = vmatprep.subr.mxu0 %v339
    %1360 = vmatpush1.msra.mxu0 %v338
    %1361 = vmatprep.subr.mxu0 %v336
    %1362 = vmatpush1.msra.mxu0 %v335
    %1363 = vmatprep.subr.mxu0 %v333
    %1364 = vmatpush1.msra.mxu0 %v332
    %1365 = vmatprep.subr.mxu0 %v330
    %1366 = vmatpush1.msra.mxu0 %v329
    %1367 = vmatprep.subr.mxu0 %v327
    %1368 = vmatpush1.msra.mxu0 %v326
    %1369 = vmatprep.subr.mxu0 %v324
    %1370 = vmatpush1.msra.mxu0 %v323
    %1371 = vmatprep.subr.mxu0 %v321
    %1372 = vmatpush1.msra.mxu0 %v320
    %1373 = vmatprep.subr.mxu0 %v318
    %1374 = vmatpush1.msra.mxu0 %v317
    %1375 = vmatprep.subr.mxu0 %v315
    %1376 = vmatpush1.msra.mxu0 %v314
    %1377 = vmatprep.subr.mxu0 %v312
    %1378 = vmatpush1.msra.mxu0 %v311
    %1379 = vmatprep.subr.mxu0 %v309
    %1380 = vmatpush1.msra.mxu0 %v308
    %1381 = vmatprep.subr.mxu0 %v306
    %1382 = vmatpush1.msra.mxu0 %v305
    %1383 = vmatprep.subr.mxu0 %v303
    %1384 = vmatpush1.msra.mxu0 %v302
    %1385 = vmatprep.subr.mxu0 %v300
    %1386 = vmatpush1.msra.mxu0 %v299
    %1387 = vmatprep.subr.mxu0 0.0
    %1388 = vmatpush2.msra.mxu0 0.0
    %1389 = vmatprep.subr.mxu0 0.0
    %1390 = vmatpush2.msra.mxu0 0.0
    %1391 = vmatprep.subr.mxu0 0.0
    %1392 = vmatpush2.msra.mxu0 0.0
    %1393 = vmatprep.subr.mxu0 0.0
    %1394 = vmatpush2.msra.mxu0 0.0
    %1395 = vmatprep.subr.mxu0 0.0
    %1396 = vmatpush2.msra.mxu0 0.0
    %1397 = vmatprep.subr.mxu0 0.0
    %1398 = vmatpush2.msra.mxu0 0.0
    %1399 = vmatprep.subr.mxu0 0.0
    %1400 = vmatpush2.msra.mxu0 0.0
    %1401 = vmatprep.subr.mxu0 0.0
    %1402 = vmatpush2.msra.mxu0 0.0
    %1403 = vmatprep.subr.mxu0 0.0
    %1404 = vmatpush2.msra.mxu0 0.0
    %1405 = vmatprep.subr.mxu0 0.0
    %1406 = vmatpush2.msra.mxu0 0.0
    %1407 = vmatprep.subr.mxu0 0.0
    %1408 = vmatpush2.msra.mxu0 0.0
    %1409 = vmatprep.subr.mxu0 0.0
    %1410 = vmatpush2.msra.mxu0 0.0
    %1411 = vmatprep.subr.mxu0 0.0
    %1412 = vmatpush2.msra.mxu0 0.0
    %1413 = vmatprep.subr.mxu0 0.0
    %1414 = vmatpush2.msra.mxu0 0.0
    %1415 = vmatprep.subr.mxu0 0.0
    %1416 = vmatpush2.msra.mxu0 0.0
    %1417 = vmatprep.subr.mxu0 0.0
    %1418 = vmatpush2.msra.mxu0 0.0
    %1419 = vmatprep.mubr.f32.mxu0 0.0
    %1420 = vmatmul.mubr.f32.gmra.mxu0 %v1349
    %v1421 = vpop.f32.mrf.mxu0
    %v1422 = vadd.f32 0.0, %v1421
    %v1423 = vpop.f32.mrf.mxu0
    %v1424 = vadd.f32 0.0, %v1423
    %1425 = vdwg.mxu0
    %1426 = vmatprep.subr.mxu0 0.0
    %1427 = vmatpush1.msra.mxu0 %v346
    %1428 = vmatprep.subr.mxu0 0.0
    %1429 = vmatpush1.msra.mxu0 %v343
    %1430 = vmatprep.subr.mxu0 0.0
    %1431 = vmatpush1.msra.mxu0 %v340
    %1432 = vmatprep.subr.mxu0 0.0
    %1433 = vmatpush1.msra.mxu0 %v337
    %1434 = vmatprep.subr.mxu0 0.0
    %1435 = vmatpush1.msra.mxu0 %v334
    %1436 = vmatprep.subr.mxu0 0.0
    %1437 = vmatpush1.msra.mxu0 %v331
    %1438 = vmatprep.subr.mxu0 0.0
    %1439 = vmatpush1.msra.mxu0 %v328
    %1440 = vmatprep.subr.mxu0 0.0
    %1441 = vmatpush1.msra.mxu0 %v325
    %1442 = vmatprep.subr.mxu0 0.0
    %1443 = vmatpush1.msra.mxu0 %v322
    %1444 = vmatprep.subr.mxu0 0.0
    %1445 = vmatpush1.msra.mxu0 %v319
    %1446 = vmatprep.subr.mxu0 0.0
    %1447 = vmatpush1.msra.mxu0 %v316
    %1448 = vmatprep.subr.mxu0 0.0
    %1449 = vmatpush1.msra.mxu0 %v313
    %1450 = vmatprep.subr.mxu0 0.0
    %1451 = vmatpush1.msra.mxu0 %v310
    %1452 = vmatprep.subr.mxu0 0.0
    %1453 = vmatpush1.msra.mxu0 %v307
    %1454 = vmatprep.subr.mxu0 0.0
    %1455 = vmatpush1.msra.mxu0 %v304
    %1456 = vmatprep.subr.mxu0 0.0
    %1457 = vmatpush1.msra.mxu0 %v301
    %1458 = vmatprep.subr.mxu0 0.0
    %1459 = vmatpush2.msra.mxu0 0.0
    %1460 = vmatprep.subr.mxu0 0.0
    %1461 = vmatpush2.msra.mxu0 0.0
    %1462 = vmatprep.subr.mxu0 0.0
    %1463 = vmatpush2.msra.mxu0 0.0
    %1464 = vmatprep.subr.mxu0 0.0
    %1465 = vmatpush2.msra.mxu0 0.0
    %1466 = vmatprep.subr.mxu0 0.0
    %1467 = vmatpush2.msra.mxu0 0.0
    %1468 = vmatprep.subr.mxu0 0.0
    %1469 = vmatpush2.msra.mxu0 0.0
    %1470 = vmatprep.subr.mxu0 0.0
    %1471 = vmatpush2.msra.mxu0 0.0
    %1472 = vmatprep.subr.mxu0 0.0
    %1473 = vmatpush2.msra.mxu0 0.0
    %1474 = vmatprep.subr.mxu0 0.0
    %1475 = vmatpush2.msra.mxu0 0.0
    %1476 = vmatprep.subr.mxu0 0.0
    %1477 = vmatpush2.msra.mxu0 0.0
    %1478 = vmatprep.subr.mxu0 0.0
    %1479 = vmatpush2.msra.mxu0 0.0
    %1480 = vmatprep.subr.mxu0 0.0
    %1481 = vmatpush2.msra.mxu0 0.0
    %1482 = vmatprep.subr.mxu0 0.0
    %1483 = vmatpush2.msra.mxu0 0.0
    %1484 = vmatprep.subr.mxu0 0.0
    %1485 = vmatpush2.msra.mxu0 0.0
    %1486 = vmatprep.subr.mxu0 0.0
    %1487 = vmatpush2.msra.mxu0 0.0
    %1488 = vmatprep.subr.mxu0 0.0
    %1489 = vmatpush2.msra.mxu0 0.0
    %1490 = vmatprep.mubr.f32.mxu0 0.0
    %1491 = vmatmul.mubr.f32.gmra.mxu0 %v1349
    %v1492 = vpop.f32.mrf.mxu0
    %v1493 = vadd.f32 0.0, %v1492
    %v1494 = vpop.f32.mrf.mxu0
    %1495 = vdwg.mxu0
    %v1496 = vadd.f32 %v1352, %v1422
    %v1497 = vxor.u32 %v1496, 2147483648
    %v1498 = vmul.f32 %v1497, 1.442695
    %v1499 = vpow.pop %v1498
    %v1500 = vadd.f32 %v1499, 1.0
    %v1501 = vrcp.pop %v1500
    %v1502 = vmul.f32 1.0, %v1501
    %v1503 = vadd.f32 %v1353, %v1424
    %v1504 = vxor.u32 %v1503, 2147483648
    %v1505 = vmul.f32 %v1504, 1.442695
    %v1506 = vpow.pop %v1505
    %v1507 = vadd.f32 %v1506, 1.0
    %v1508 = vrcp.pop %v1507
    %v1509 = vmul.f32 1.0, %v1508
    %v1510 = vadd.f32 %v1493, %v506
    %v1511 = vmul.f32 %v1502, %v1510
    %v1512 = vadd.f32 %v1354, %v1511
    %v1513 = vtanh.pop %v1512
    %v1514 = vsub.f32 %v1349, %v1513
    %v1515 = vmul.f32 %v1509, %v1514
    %v1516 = vadd.f32 %v1513, %v1515
    %vm1517 = vcmp.eq.s32.totalorder %v295, 6
    %v1518 = vsel %vm1517, %v1516, %v1351
    %v1519 = vld [vmem:[#allocation2 + $0xa8] sm:$0xff]
    %v1520 = vld [vmem:[#allocation2 + $0xb0] sm:$0xff]
    %v1521 = vld [vmem:[#allocation2 + $0xb8] sm:$0xff]
    %1522 = vmatprep.subr.mxu0 %v345
    %1523 = vmatpush1.msra.mxu0 %v344
    %1524 = vmatprep.subr.mxu0 %v342
    %1525 = vmatpush1.msra.mxu0 %v341
    %1526 = vmatprep.subr.mxu0 %v339
    %1527 = vmatpush1.msra.mxu0 %v338
    %1528 = vmatprep.subr.mxu0 %v336
    %1529 = vmatpush1.msra.mxu0 %v335
    %1530 = vmatprep.subr.mxu0 %v333
    %1531 = vmatpush1.msra.mxu0 %v332
    %1532 = vmatprep.subr.mxu0 %v330
    %1533 = vmatpush1.msra.mxu0 %v329
    %1534 = vmatprep.subr.mxu0 %v327
    %1535 = vmatpush1.msra.mxu0 %v326
    %1536 = vmatprep.subr.mxu0 %v324
    %1537 = vmatpush1.msra.mxu0 %v323
    %1538 = vmatprep.subr.mxu0 %v321
    %1539 = vmatpush1.msra.mxu0 %v320
    %1540 = vmatprep.subr.mxu0 %v318
    %1541 = vmatpush1.msra.mxu0 %v317
    %1542 = vmatprep.subr.mxu0 %v315
    %1543 = vmatpush1.msra.mxu0 %v314
    %1544 = vmatprep.subr.mxu0 %v312
    %1545 = vmatpush1.msra.mxu0 %v311
    %1546 = vmatprep.subr.mxu0 %v309
    %1547 = vmatpush1.msra.mxu0 %v308
    %1548 = vmatprep.subr.mxu0 %v306
    %1549 = vmatpush1.msra.mxu0 %v305
    %1550 = vmatprep.subr.mxu0 %v303
    %1551 = vmatpush1.msra.mxu0 %v302
    %1552 = vmatprep.subr.mxu0 %v300
    %1553 = vmatpush1.msra.mxu0 %v299
    %1554 = vmatprep.subr.mxu0 0.0
    %1555 = vmatpush2.msra.mxu0 0.0
    %1556 = vmatprep.subr.mxu0 0.0
    %1557 = vmatpush2.msra.mxu0 0.0
    %1558 = vmatprep.subr.mxu0 0.0
    %1559 = vmatpush2.msra.mxu0 0.0
    %1560 = vmatprep.subr.mxu0 0.0
    %1561 = vmatpush2.msra.mxu0 0.0
    %1562 = vmatprep.subr.mxu0 0.0
    %1563 = vmatpush2.msra.mxu0 0.0
    %1564 = vmatprep.subr.mxu0 0.0
    %1565 = vmatpush2.msra.mxu0 0.0
    %1566 = vmatprep.subr.mxu0 0.0
    %1567 = vmatpush2.msra.mxu0 0.0
    %1568 = vmatprep.subr.mxu0 0.0
    %1569 = vmatpush2.msra.mxu0 0.0
    %1570 = vmatprep.subr.mxu0 0.0
    %1571 = vmatpush2.msra.mxu0 0.0
    %1572 = vmatprep.subr.mxu0 0.0
    %1573 = vmatpush2.msra.mxu0 0.0
    %1574 = vmatprep.subr.mxu0 0.0
    %1575 = vmatpush2.msra.mxu0 0.0
    %1576 = vmatprep.subr.mxu0 0.0
    %1577 = vmatpush2.msra.mxu0 0.0
    %1578 = vmatprep.subr.mxu0 0.0
    %1579 = vmatpush2.msra.mxu0 0.0
    %1580 = vmatprep.subr.mxu0 0.0
    %1581 = vmatpush2.msra.mxu0 0.0
    %1582 = vmatprep.subr.mxu0 0.0
    %1583 = vmatpush2.msra.mxu0 0.0
    %1584 = vmatprep.subr.mxu0 0.0
    %1585 = vmatpush2.msra.mxu0 0.0
    %1586 = vmatprep.mubr.f32.mxu0 0.0
    %1587 = vmatmul.mubr.f32.gmra.mxu0 %v1516
    %v1588 = vpop.f32.mrf.mxu0
    %v1589 = vadd.f32 0.0, %v1588
    %v1590 = vpop.f32.mrf.mxu0
    %v1591 = vadd.f32 0.0, %v1590
    %1592 = vdwg.mxu0
    %1593 = vmatprep.subr.mxu0 0.0
    %1594 = vmatpush1.msra.mxu0 %v346
    %1595 = vmatprep.subr.mxu0 0.0
    %1596 = vmatpush1.msra.mxu0 %v343
    %1597 = vmatprep.subr.mxu0 0.0
    %1598 = vmatpush1.msra.mxu0 %v340
    %1599 = vmatprep.subr.mxu0 0.0
    %1600 = vmatpush1.msra.mxu0 %v337
    %1601 = vmatprep.subr.mxu0 0.0
    %1602 = vmatpush1.msra.mxu0 %v334
    %1603 = vmatprep.subr.mxu0 0.0
    %1604 = vmatpush1.msra.mxu0 %v331
    %1605 = vmatprep.subr.mxu0 0.0
    %1606 = vmatpush1.msra.mxu0 %v328
    %1607 = vmatprep.subr.mxu0 0.0
    %1608 = vmatpush1.msra.mxu0 %v325
    %1609 = vmatprep.subr.mxu0 0.0
    %1610 = vmatpush1.msra.mxu0 %v322
    %1611 = vmatprep.subr.mxu0 0.0
    %1612 = vmatpush1.msra.mxu0 %v319
    %1613 = vmatprep.subr.mxu0 0.0
    %1614 = vmatpush1.msra.mxu0 %v316
    %1615 = vmatprep.subr.mxu0 0.0
    %1616 = vmatpush1.msra.mxu0 %v313
    %1617 = vmatprep.subr.mxu0 0.0
    %1618 = vmatpush1.msra.mxu0 %v310
    %1619 = vmatprep.subr.mxu0 0.0
    %1620 = vmatpush1.msra.mxu0 %v307
    %1621 = vmatprep.subr.mxu0 0.0
    %1622 = vmatpush1.msra.mxu0 %v304
    %1623 = vmatprep.subr.mxu0 0.0
    %1624 = vmatpush1.msra.mxu0 %v301
    %1625 = vmatprep.subr.mxu0 0.0
    %1626 = vmatpush2.msra.mxu0 0.0
    %1627 = vmatprep.subr.mxu0 0.0
    %1628 = vmatpush2.msra.mxu0 0.0
    %1629 = vmatprep.subr.mxu0 0.0
    %1630 = vmatpush2.msra.mxu0 0.0
    %1631 = vmatprep.subr.mxu0 0.0
    %1632 = vmatpush2.msra.mxu0 0.0
    %1633 = vmatprep.subr.mxu0 0.0
    %1634 = vmatpush2.msra.mxu0 0.0
    %1635 = vmatprep.subr.mxu0 0.0
    %1636 = vmatpush2.msra.mxu0 0.0
    %1637 = vmatprep.subr.mxu0 0.0
    %1638 = vmatpush2.msra.mxu0 0.0
    %1639 = vmatprep.subr.mxu0 0.0
    %1640 = vmatpush2.msra.mxu0 0.0
    %1641 = vmatprep.subr.mxu0 0.0
    %1642 = vmatpush2.msra.mxu0 0.0
    %1643 = vmatprep.subr.mxu0 0.0
    %1644 = vmatpush2.msra.mxu0 0.0
    %1645 = vmatprep.subr.mxu0 0.0
    %1646 = vmatpush2.msra.mxu0 0.0
    %1647 = vmatprep.subr.mxu0 0.0
    %1648 = vmatpush2.msra.mxu0 0.0
    %1649 = vmatprep.subr.mxu0 0.0
    %1650 = vmatpush2.msra.mxu0 0.0
    %1651 = vmatprep.subr.mxu0 0.0
    %1652 = vmatpush2.msra.mxu0 0.0
    %1653 = vmatprep.subr.mxu0 0.0
    %1654 = vmatpush2.msra.mxu0 0.0
    %1655 = vmatprep.subr.mxu0 0.0
    %1656 = vmatpush2.msra.mxu0 0.0
    %1657 = vmatprep.mubr.f32.mxu0 0.0
    %1658 = vmatmul.mubr.f32.gmra.mxu0 %v1516
    %v1659 = vpop.f32.mrf.mxu0
    %v1660 = vadd.f32 0.0, %v1659
    %v1661 = vpop.f32.mrf.mxu0
    %1662 = vdwg.mxu0
    %v1663 = vadd.f32 %v1519, %v1589
    %v1664 = vxor.u32 %v1663, 2147483648
    %v1665 = vmul.f32 %v1664, 1.442695
    %v1666 = vpow.pop %v1665
    %v1667 = vadd.f32 %v1666, 1.0
    %v1668 = vrcp.pop %v1667
    %v1669 = vmul.f32 1.0, %v1668
    %v1670 = vadd.f32 %v1520, %v1591
    %v1671 = vxor.u32 %v1670, 2147483648
    %v1672 = vmul.f32 %v1671, 1.442695
    %v1673 = vpow.pop %v1672
    %v1674 = vadd.f32 %v1673, 1.0
    %v1675 = vrcp.pop %v1674
    %v1676 = vmul.f32 1.0, %v1675
    %v1677 = vadd.f32 %v1660, %v506
    %v1678 = vmul.f32 %v1669, %v1677
    %v1679 = vadd.f32 %v1521, %v1678
    %v1680 = vtanh.pop %v1679
    %v1681 = vsub.f32 %v1516, %v1680
    %v1682 = vmul.f32 %v1676, %v1681
    %v1683 = vadd.f32 %v1680, %v1682
    %vm1684 = vcmp.eq.s32.totalorder %v295, 7
    %v1685 = vsel %vm1684, %v1683, %v1518
    %1686 = vst [vmem:[%s6] sm:$0xff] %v1685
    // Predicated region
    $region34: #{seq_encoder_forward.1} parent=1 // pred_check
      _
    $region35: #{seq_encoder_forward.1} parent=1 // pred_check_branch
      %1688 = sbr.rel (0) target = $region37
    $region36: #{seq_encoder_forward.1} parent=1 // pred_region
      _
    $region37: #{seq_encoder_forward.1} parent=1 // pred_fallthru
      _
    // Predicated region
    $region38: #{seq_encoder_forward.1} parent=1 // pred_check
      _
    $region39: #{seq_encoder_forward.1} parent=1 // pred_check_branch
      %1690 = sbr.rel (0) target = $region41
    $region40: #{seq_encoder_forward.1} parent=1 // pred_region
      _
    $region41: #{seq_encoder_forward.1} parent=1 // pred_fallthru
      _
    %1691 = vsyncpa [#allocation4], 1
    %1692 = vsyncpa [#allocation6], 1

</llo_original>
